<compile_context>
chip_gen: v5e
topology: v5e:2x2
jax: 0.10.0
libtpu: 0.0.40
codegen_flags: <defaults>
</compile_context>

<pallas_src>
import functools

import jax
import jax.numpy as jnp
from jax.experimental import pallas as pl
from jax.experimental.pallas import tpu as pltpu

_LN_EPS = 1e-5          # PyTorch nn.LayerNorm default
_SQRT_HALF = 0.7071067811865476


def _erf(x):
    # Abramowitz & Stegun 7.1.26 rational approximation of erf (|err| <= 1.5e-7),
    # built only from exp/abs/where; polynomial grouped to shorten the VALU chain.
    a1, a2, a3, a4, a5 = 0.254829592, -0.284496736, 1.421413741, -1.453152027, 1.061405429
    p = 0.3275911
    ax = jnp.abs(x)
    t = 1.0 / (1.0 + p * ax)
    t2 = t * t
    poly = (a1 + a2 * t) * t + ((a3 + a4 * t) + a5 * t2) * (t2 * t)
    y = 1.0 - poly * jnp.exp(-ax * ax)
    return jnp.where(x < 0.0, -y, y)


def _gelu_exact(x):
    # PyTorch nn.GELU() default = exact-erf GELU (approximated to ~1.5e-7 here).
    return 0.5 * x * (1.0 + _erf(x * _SQRT_HALF))


def _layernorm_raw(x):
    # LayerNorm WITHOUT the affine (gamma/beta are folded into the next matmul).
    mu = jnp.mean(x, axis=-1, keepdims=True)
    xc = x - mu
    var = jnp.mean(xc * xc, axis=-1, keepdims=True)
    return xc * jax.lax.rsqrt(var + _LN_EPS)


def prepare_params(params, *, num_heads):
    """One-time host-side folding + bf16 pre-cast of the CrossBlock parameters.

    Folds LN1 affine and the attention scale into Wq (plus a q bias), LN2 affine
    into W1/b1m, and fuses Wk||Wv into a single (C, 2C) projection.  Weights are
    cast to bf16 once (MXU-native); biases stay f32.
    """
    f32, bf16 = jnp.float32, jnp.bfloat16
    hi = jax.lax.Precision.HIGHEST
    C = params["Wq"].shape[0]
    hidden = params["W1"].shape[1]
    d = C // num_heads
    scale = d ** -0.5

    g1 = params["g1"].astype(f32)
    b1 = params["b1"].astype(f32)
    g2 = params["g2"].astype(f32)
    b2 = params["b2"].astype(f32)

    # LN1 affine + attention scale folded into the Q projection.
    Wq_f = (g1[:, None] * params["Wq"]) * scale
    bq_f = jnp.dot(b1, params["Wq"], precision=hi) * scale
    # Fused K||V projection: one GEMM on the target slab, 2C output lanes.
    Wkv = jnp.concatenate([params["Wk"], params["Wv"]], axis=1)
    # LN2 affine folded into the first MLP matmul.
    W1_f = g2[:, None] * params["W1"]
    b1m_f = params["b1m"] + jnp.dot(b2, params["W1"], precision=hi)

    return {
        "Wq": Wq_f.astype(bf16),
        "bq": bq_f.reshape(1, C).astype(f32),
        "Wkv": Wkv.astype(bf16),
        "Wp": params["Wp"].astype(bf16),
        "bp": params["bp"].reshape(1, C).astype(f32),
        "W1": W1_f.astype(bf16),
        "b1m": b1m_f.reshape(1, hidden).astype(f32),
        "W2": params["W2"].astype(bf16),
        "b2m": params["b2m"].reshape(1, C).astype(f32),
    }


def _cross_block_kernel(x_ref, t_ref, wq_ref, bq_ref, wkv_ref, wp_ref, bp_ref,
                        w1_ref, b1m_ref, w2_ref, b2m_ref, o_ref, attn_sc,
                        *, num_heads, batch, tokens):
    f32, bf16 = jnp.float32, jnp.bfloat16
    x = x_ref[...]          # (B*N, C) f32 query tokens, batch folded into rows
    tgt = t_ref[...]        # (B*N, C) f32 target tokens
    c = x.shape[-1]
    d = c // num_heads

    # -------- attention branch: x + Attn(LN1(x), target) --------
    # LN1 affine + scale already folded into wq/bq -> only raw normalization here.
    xn = _layernorm_raw(x)
    q = jnp.dot(xn.astype(bf16), wq_ref[...], preferred_element_type=f32) + bq_ref[...]
    # Single fused K||V GEMM on the target slab; split by static column slice.
    kv = jnp.dot(tgt.astype(bf16), wkv_ref[...], preferred_element_type=f32)
    k = kv[:, :c]
    v = kv[:, c:]

    # Re-expose the batch dim (leading-dim split only; lane dim untouched).
    q3 = q.reshape(batch, tokens, c)
    k3 = k.reshape(batch, tokens, c)
    v3 = v.reshape(batch, tokens, c)

    # Per-head attention (heads statically unrolled); each stage is one dot_general
    # batched over the batch dim.  Head outputs go to a VMEM scratch slab at static
    # lane offsets (no lane-axis concatenate).
    for h in range(num_heads):
        sl = slice(h * d, (h + 1) * d)
        qh = q3[:, :, sl].astype(bf16)              # (B, N, d)
        kh = k3[:, :, sl].astype(bf16)
        vh = v3[:, :, sl].astype(bf16)
        s = jnp.einsum("bnd,bmd->bnm", qh, kh, preferred_element_type=f32)  # scale pre-folded
        s = s - jnp.max(s, axis=-1, keepdims=True)
        p = jnp.exp(s)
        p = p / jnp.sum(p, axis=-1, keepdims=True)  # exact softmax (no approx reciprocal)
        oh = jnp.einsum("bnm,bmd->bnd", p.astype(bf16), vh, preferred_element_type=f32)
        attn_sc[:, :, sl] = oh                      # static lane-offset store

    attn = attn_sc[...].reshape(batch * tokens, c)
    # Single dense output projection (one (B*N,C) @ (C,C) GEMM).
    attn = jnp.dot(attn.astype(bf16), wp_ref[...], preferred_element_type=f32) + bp_ref[...]
    y1 = x + attn

    # -------- MLP branch: y1 + MLP(LN2(y1)) --------
    yn = _layernorm_raw(y1)                          # LN2 affine folded into w1/b1m
    hmid = jnp.dot(yn.astype(bf16), w1_ref[...], preferred_element_type=f32) + b1m_ref[...]
    hmid = _gelu_exact(hmid)
    y2 = y1 + jnp.dot(hmid.astype(bf16), w2_ref[...], preferred_element_type=f32) + b2m_ref[...]

    o_ref[...] = y2.astype(o_ref.dtype)


def cross_block(query, target, prepped, *, num_heads):
    """query/target: (B, N, C) float32; prepped = prepare_params(...). Returns (B, N, C)."""
    B, N, C = query.shape
    assert target.shape == query.shape
    assert C % num_heads == 0, "channel dim must be divisible by num_heads"

    # Fold the batch into rows: every GEMM sees M = B*N rows, LN/MLP run on a slab.
    q2d = query.reshape(B * N, C)
    t2d = target.reshape(B * N, C)

    args = (q2d, t2d,
            prepped["Wq"], prepped["bq"], prepped["Wkv"],
            prepped["Wp"], prepped["bp"],
            prepped["W1"], prepped["b1m"], prepped["W2"], prepped["b2m"])

    # Everything fits VMEM at these sizes -> single grid-less invocation (weights
    # resident once, no double-buffering).  See TODO(synk) at top for production tiling.
    vmem = lambda: pl.BlockSpec(memory_space=pltpu.MemorySpace.VMEM)
    out2d = pl.pallas_call(
        functools.partial(_cross_block_kernel,
                          num_heads=num_heads, batch=B, tokens=N),
        out_shape=jax.ShapeDtypeStruct((B * N, C), query.dtype),
        in_specs=[vmem() for _ in args],
        out_specs=vmem(),
        scratch_shapes=[pltpu.VMEM((B, N, C), jnp.float32)],
    )(*args)
    return out2d.reshape(B, N, C)


def _reference_bf16_matched(query, target, prepped, *, num_heads):
    """Pure-JAX reference mirroring the kernel's exact foldings and bf16 cast points."""
    B, N, C = query.shape
    d = C // num_heads
    f32, bf16 = jnp.float32, jnp.bfloat16
    x = query.reshape(B * N, C).astype(f32)
    tgt = target.reshape(B * N, C).astype(f32)

    xn = _layernorm_raw(x)
    q = jnp.dot(xn.astype(bf16), prepped["Wq"], preferred_element_type=f32) + prepped["bq"]
    kv = jnp.dot(tgt.astype(bf16), prepped["Wkv"], preferred_element_type=f32)
    k, v = kv[:, :C], kv[:, C:]

    q3 = q.reshape(B, N, C)
    k3 = k.reshape(B, N, C)
    v3 = v.reshape(B, N, C)
    outs = []
    for h in range(num_heads):
        sl = slice(h * d, (h + 1) * d)
        qh = q3[:, :, sl].astype(bf16)
        kh = k3[:, :, sl].astype(bf16)
        vh = v3[:, :, sl].astype(bf16)
        s = jnp.einsum("bnd,bmd->bnm", qh, kh, preferred_element_type=f32)
        s = s - jnp.max(s, axis=-1, keepdims=True)
        p = jnp.exp(s)
        p = p / jnp.sum(p, axis=-1, keepdims=True)
        outs.append(jnp.einsum("bnm,bmd->bnd", p.astype(bf16), vh, preferred_element_type=f32))
    attn = jnp.concatenate(outs, axis=-1).reshape(B * N, C)
    attn = jnp.dot(attn.astype(bf16), prepped["Wp"], preferred_element_type=f32) + prepped["bp"]
    y1 = x + attn

    yn = _layernorm_raw(y1)
    h1 = jnp.dot(yn.astype(bf16), prepped["W1"], preferred_element_type=f32) + prepped["b1m"]
    h1 = jax.nn.gelu(h1, approximate=False)
    y2 = y1 + jnp.dot(h1.astype(bf16), prepped["W2"], preferred_element_type=f32) + prepped["b2m"]
    return y2.reshape(B, N, C)


def _reference_pytorch_f32(query, target, params, *, num_heads):
    """Exact-f32 reference mirroring the PyTorch forward (un-folded params)."""
    B, N, C = query.shape
    D = C // num_heads
    hi = jax.lax.Precision.HIGHEST

    def ln(x, g, b):
        mu = jnp.mean(x, axis=-1, keepdims=True)
        var = jnp.mean((x - mu) ** 2, axis=-1, keepdims=True)
        return (x - mu) * jax.lax.rsqrt(var + _LN_EPS) * g + b

    xn = ln(query, params["g1"], params["b1"])
    q = jnp.einsum("bnc,cd->bnd", xn, params["Wq"], precision=hi)
    k = jnp.einsum("bnc,cd->bnd", target, params["Wk"], precision=hi)
    v = jnp.einsum("bnc,cd->bnd", target, params["Wv"], precision=hi)
    q = q.reshape(B, N, num_heads, D).transpose(0, 2, 1, 3)
    k = k.reshape(B, N, num_heads, D).transpose(0, 2, 1, 3)
    v = v.reshape(B, N, num_heads, D).transpose(0, 2, 1, 3)
    s = jnp.einsum("bhnd,bhmd->bhnm", q, k, precision=hi) * (D ** -0.5)
    p = jax.nn.softmax(s, axis=-1)
    out = jnp.einsum("bhnm,bhmd->bhnd", p, v, precision=hi)
    out = out.transpose(0, 2, 1, 3).reshape(B, N, C)
    out = jnp.einsum("bnc,cd->bnd", out, params["Wp"], precision=hi) + params["bp"]
    y1 = query + out
    yn = ln(y1, params["g2"], params["b2"])
    h = jnp.einsum("bnc,ch->bnh", yn, params["W1"], precision=hi) + params["b1m"]
    h = jax.nn.gelu(h, approximate=False)
    return y1 + jnp.einsum("bnh,hc->bnc", h, params["W2"], precision=hi) + params["b2m"]


if __name__ == "__main__":
    B, N, C = 2, 8, 32
    NUM_HEADS = 4
    MLP_RATIO = 4.0
    hidden = int(C * MLP_RATIO)

    key = jax.random.PRNGKey(0)
    keys = jax.random.split(key, 16)
    query = jax.random.normal(keys[0], (B, N, C), jnp.float32)
    target = jax.random.normal(keys[1], (B, N, C), jnp.float32)

    def w(k, shape, fan_in):
        return jax.random.normal(k, shape, jnp.float32) / jnp.sqrt(float(fan_in))

    params = {
        "g1": 1.0 + 0.1 * jax.random.normal(keys[2], (C,), jnp.float32),
        "b1": 0.1 * jax.random.normal(keys[3], (C,), jnp.float32),
        "g2": 1.0 + 0.1 * jax.random.normal(keys[4], (C,), jnp.float32),
        "b2": 0.1 * jax.random.normal(keys[5], (C,), jnp.float32),
        "Wq": w(keys[6], (C, C), C),          # qkv_bias=False -> no q/k/v biases
        "Wk": w(keys[7], (C, C), C),
        "Wv": w(keys[8], (C, C), C),
        "Wp": w(keys[9], (C, C), C),
        "bp": 0.01 * jax.random.normal(keys[10], (C,), jnp.float32),
        "W1": w(keys[11], (C, hidden), C),
        "b1m": 0.01 * jax.random.normal(keys[12], (hidden,), jnp.float32),
        "W2": w(keys[13], (hidden, C), hidden),
        "b2m": 0.01 * jax.random.normal(keys[14], (C,), jnp.float32),
    }

    prepped = prepare_params(params, num_heads=NUM_HEADS)

    out = cross_block(query, target, prepped, num_heads=NUM_HEADS)
    out = jax.block_until_ready(out)
    assert out.shape == (B, N, C) and out.dtype == jnp.float32

    # Strong check: reference with identical host-side foldings and bf16 cast points.
    # Remaining diffs are only the erf polynomial (~1.5e-7) and any hardware
    # transcendental (exp/rsqrt) precision differences inside Mosaic.
    ref_bf16 = _reference_bf16_matched(query, target, prepped, num_heads=NUM_HEADS)
    err_bf16 = float(jnp.max(jnp.abs(out - ref_bf16)))
    assert jnp.allclose(out, ref_bf16, rtol=5e-3, atol=5e-3), f"bf16-matched max err {err_bf16}"

    # Sanity check vs. the full-f32 (PyTorch-exact) reference: difference is the
    # expected bf16-MXU-input quantization, bounded here at 5e-2.
    ref_f32 = _reference_pytorch_f32(query, target, params, num_heads=NUM_HEADS)
    err_f32 = float(jnp.max(jnp.abs(out - ref_f32)))
    assert jnp.allclose(out, ref_f32, rtol=5e-2, atol=5e-2), f"f32 max err {err_f32}"

    print("KERNEL_OK")
</pallas_src>

<mosaic_0001>
module attributes {stable_mosaic.version = 11 : i64} {
  func.func @_cross_block_kernel(%arg0: memref<16x32xf32, #tpu.memory_space<vmem>>, %arg1: memref<16x32xf32, #tpu.memory_space<vmem>>, %arg2: memref<32x32xbf16, #tpu.memory_space<vmem>>, %arg3: memref<1x32xf32, #tpu.memory_space<vmem>>, %arg4: memref<32x64xbf16, #tpu.memory_space<vmem>>, %arg5: memref<32x32xbf16, #tpu.memory_space<vmem>>, %arg6: memref<1x32xf32, #tpu.memory_space<vmem>>, %arg7: memref<32x128xbf16, #tpu.memory_space<vmem>>, %arg8: memref<1x128xf32, #tpu.memory_space<vmem>>, %arg9: memref<128x32xbf16, #tpu.memory_space<vmem>>, %arg10: memref<1x32xf32, #tpu.memory_space<vmem>>, %arg11: memref<16x32xf32, #tpu.memory_space<vmem>>, %arg12: memref<2x8x32xf32, #tpu.memory_space<vmem>>) attributes {dimension_semantics = [], scalar_prefetch = 0 : i64, scratch_operands = 1 : i64, tpu.core_type = #tpu.core_type<tc>} {
    %c0 = arith.constant 0 : index
    %c0_0 = arith.constant 0 : index
    %0 = vector.load %arg0[%c0, %c0_0] : memref<16x32xf32, #tpu.memory_space<vmem>>, vector<16x32xf32>
    %c0_1 = arith.constant 0 : index
    %c0_2 = arith.constant 0 : index
    %1 = vector.load %arg1[%c0_1, %c0_2] : memref<16x32xf32, #tpu.memory_space<vmem>>, vector<16x32xf32>
    %cst = arith.constant dense<0.000000e+00> : vector<16xf32>
    %2 = vector.multi_reduction <add>, %0, %cst [1] : vector<16x32xf32> to vector<16xf32>
    %3 = vector.shape_cast %2 : vector<16xf32> to vector<16x1xf32>
    %cst_3 = arith.constant 3.200000e+01 : f32
    %4 = vector.broadcast %cst_3 : f32 to vector<16x1xf32>
    %5 = arith.divf %3, %4 : vector<16x1xf32>
    %6 = vector.broadcast %5 : vector<16x1xf32> to vector<16x32xf32>
    %7 = arith.subf %0, %6 : vector<16x32xf32>
    %8 = arith.mulf %7, %7 : vector<16x32xf32>
    %cst_4 = arith.constant dense<0.000000e+00> : vector<16xf32>
    %9 = vector.multi_reduction <add>, %8, %cst_4 [1] : vector<16x32xf32> to vector<16xf32>
    %10 = vector.shape_cast %9 : vector<16xf32> to vector<16x1xf32>
    %cst_5 = arith.constant 3.200000e+01 : f32
    %11 = vector.broadcast %cst_5 : f32 to vector<16x1xf32>
    %12 = arith.divf %10, %11 : vector<16x1xf32>
    %cst_6 = arith.constant 9.99999974E-6 : f32
    %13 = vector.broadcast %cst_6 : f32 to vector<16x1xf32>
    %14 = arith.addf %12, %13 : vector<16x1xf32>
    %15 = math.rsqrt %14 : vector<16x1xf32>
    %16 = vector.broadcast %15 : vector<16x1xf32> to vector<16x32xf32>
    %17 = arith.mulf %7, %16 : vector<16x32xf32>
    %18 = arith.truncf %17 : vector<16x32xf32> to vector<16x32xbf16>
    %c0_7 = arith.constant 0 : index
    %c0_8 = arith.constant 0 : index
    %19 = vector.load %arg2[%c0_7, %c0_8] : memref<32x32xbf16, #tpu.memory_space<vmem>>, vector<32x32xbf16>
    %cst_9 = arith.constant dense<0.000000e+00> : vector<16x32xf32>
    %20 = tpu.matmul %18, %19, %cst_9 {dimension_numbers = #tpu.dot_dimension_numbers<[1], [0], [0], [1], [0, 0, 1, 1], [], []>} : vector<16x32xbf16>, vector<32x32xbf16>, vector<16x32xf32> -> vector<16x32xf32>
    %c0_10 = arith.constant 0 : index
    %c0_11 = arith.constant 0 : index
    %21 = vector.load %arg3[%c0_10, %c0_11] : memref<1x32xf32, #tpu.memory_space<vmem>>, vector<1x32xf32>
    %22 = vector.broadcast %21 : vector<1x32xf32> to vector<16x32xf32>
    %23 = arith.addf %20, %22 : vector<16x32xf32>
    %24 = arith.truncf %1 : vector<16x32xf32> to vector<16x32xbf16>
    %c0_12 = arith.constant 0 : index
    %c0_13 = arith.constant 0 : index
    %25 = vector.load %arg4[%c0_12, %c0_13] : memref<32x64xbf16, #tpu.memory_space<vmem>>, vector<32x64xbf16>
    %cst_14 = arith.constant dense<0.000000e+00> : vector<16x64xf32>
    %26 = tpu.matmul %24, %25, %cst_14 {dimension_numbers = #tpu.dot_dimension_numbers<[1], [0], [0], [1], [0, 0, 1, 1], [], []>} : vector<16x32xbf16>, vector<32x64xbf16>, vector<16x64xf32> -> vector<16x64xf32>
    %27 = vector.extract_strided_slice %26 {offsets = [0, 0], sizes = [16, 32], strides = [1, 1]} : vector<16x64xf32> to vector<16x32xf32>
    %28 = vector.extract_strided_slice %26 {offsets = [0, 32], sizes = [16, 32], strides = [1, 1]} : vector<16x64xf32> to vector<16x32xf32>
    %29 = vector.shape_cast %23 : vector<16x32xf32> to vector<2x8x32xf32>
    %30 = vector.shape_cast %27 : vector<16x32xf32> to vector<2x8x32xf32>
    %31 = vector.shape_cast %28 : vector<16x32xf32> to vector<2x8x32xf32>
    %32 = vector.extract_strided_slice %29 {offsets = [0, 0, 0], sizes = [2, 8, 8], strides = [1, 1, 1]} : vector<2x8x32xf32> to vector<2x8x8xf32>
    %33 = arith.truncf %32 : vector<2x8x8xf32> to vector<2x8x8xbf16>
    %34 = vector.extract_strided_slice %30 {offsets = [0, 0, 0], sizes = [2, 8, 8], strides = [1, 1, 1]} : vector<2x8x32xf32> to vector<2x8x8xf32>
    %35 = arith.truncf %34 : vector<2x8x8xf32> to vector<2x8x8xbf16>
    %36 = vector.extract_strided_slice %31 {offsets = [0, 0, 0], sizes = [2, 8, 8], strides = [1, 1, 1]} : vector<2x8x32xf32> to vector<2x8x8xf32>
    %37 = arith.truncf %36 : vector<2x8x8xf32> to vector<2x8x8xbf16>
    "tpu.trace_start"() <{level = 10 : i32, message = "bnd,bmd->bnm"}> : () -> ()
    %cst_15 = arith.constant dense<0.000000e+00> : vector<2x8x8xf32>
    %38 = tpu.matmul %33, %35, %cst_15 {dimension_numbers = #tpu.dot_dimension_numbers<[2], [2], [1], [1], [0, 0, 0, 1, 1, 1], [0], [0]>} : vector<2x8x8xbf16>, vector<2x8x8xbf16>, vector<2x8x8xf32> -> vector<2x8x8xf32>
    "tpu.trace_stop"() : () -> ()
    %cst_16 = arith.constant dense<0xFF800000> : vector<2x8xf32>
    %39 = vector.multi_reduction <maximumf>, %38, %cst_16 [2] : vector<2x8x8xf32> to vector<2x8xf32>
    %40 = vector.shape_cast %39 : vector<2x8xf32> to vector<2x8x1xf32>
    %41 = vector.broadcast %40 : vector<2x8x1xf32> to vector<2x8x8xf32>
    %42 = arith.subf %38, %41 : vector<2x8x8xf32>
    %43 = math.exp %42 : vector<2x8x8xf32>
    %cst_17 = arith.constant dense<0.000000e+00> : vector<2x8xf32>
    %44 = vector.multi_reduction <add>, %43, %cst_17 [2] : vector<2x8x8xf32> to vector<2x8xf32>
    %45 = vector.shape_cast %44 : vector<2x8xf32> to vector<2x8x1xf32>
    %46 = vector.broadcast %45 : vector<2x8x1xf32> to vector<2x8x8xf32>
    %47 = arith.divf %43, %46 : vector<2x8x8xf32>
    %48 = arith.truncf %47 : vector<2x8x8xf32> to vector<2x8x8xbf16>
    "tpu.trace_start"() <{level = 10 : i32, message = "bnm,bmd->bnd"}> : () -> ()
    %cst_18 = arith.constant dense<0.000000e+00> : vector<2x8x8xf32>
    %49 = tpu.matmul %48, %37, %cst_18 {dimension_numbers = #tpu.dot_dimension_numbers<[2], [1], [1], [2], [0, 0, 0, 1, 1, 2], [0], [0]>} : vector<2x8x8xbf16>, vector<2x8x8xbf16>, vector<2x8x8xf32> -> vector<2x8x8xf32>
    "tpu.trace_stop"() : () -> ()
    %c0_19 = arith.constant 0 : index
    %c0_20 = arith.constant 0 : index
    %c0_21 = arith.constant 0 : index
    %50 = vector.load %arg12[%c0_19, %c0_20, %c0_21] : memref<2x8x32xf32, #tpu.memory_space<vmem>>, vector<2x8x8xf32>
    tpu.vector_store %arg12[%c0_19, %c0_20, %c0_21], %49 {strides = array<i32>} : memref<2x8x32xf32, #tpu.memory_space<vmem>>, vector<2x8x8xf32>,
    %51 = vector.extract_strided_slice %29 {offsets = [0, 0, 8], sizes = [2, 8, 8], strides = [1, 1, 1]} : vector<2x8x32xf32> to vector<2x8x8xf32>
    %52 = arith.truncf %51 : vector<2x8x8xf32> to vector<2x8x8xbf16>
    %53 = vector.extract_strided_slice %30 {offsets = [0, 0, 8], sizes = [2, 8, 8], strides = [1, 1, 1]} : vector<2x8x32xf32> to vector<2x8x8xf32>
    %54 = arith.truncf %53 : vector<2x8x8xf32> to vector<2x8x8xbf16>
    %55 = vector.extract_strided_slice %31 {offsets = [0, 0, 8], sizes = [2, 8, 8], strides = [1, 1, 1]} : vector<2x8x32xf32> to vector<2x8x8xf32>
    %56 = arith.truncf %55 : vector<2x8x8xf32> to vector<2x8x8xbf16>
    "tpu.trace_start"() <{level = 10 : i32, message = "bnd,bmd->bnm"}> : () -> ()
    %cst_22 = arith.constant dense<0.000000e+00> : vector<2x8x8xf32>
    %57 = tpu.matmul %52, %54, %cst_22 {dimension_numbers = #tpu.dot_dimension_numbers<[2], [2], [1], [1], [0, 0, 0, 1, 1, 1], [0], [0]>} : vector<2x8x8xbf16>, vector<2x8x8xbf16>, vector<2x8x8xf32> -> vector<2x8x8xf32>
    "tpu.trace_stop"() : () -> ()
    %cst_23 = arith.constant dense<0xFF800000> : vector<2x8xf32>
    %58 = vector.multi_reduction <maximumf>, %57, %cst_23 [2] : vector<2x8x8xf32> to vector<2x8xf32>
    %59 = vector.shape_cast %58 : vector<2x8xf32> to vector<2x8x1xf32>
    %60 = vector.broadcast %59 : vector<2x8x1xf32> to vector<2x8x8xf32>
    %61 = arith.subf %57, %60 : vector<2x8x8xf32>
    %62 = math.exp %61 : vector<2x8x8xf32>
    %cst_24 = arith.constant dense<0.000000e+00> : vector<2x8xf32>
    %63 = vector.multi_reduction <add>, %62, %cst_24 [2] : vector<2x8x8xf32> to vector<2x8xf32>
    %64 = vector.shape_cast %63 : vector<2x8xf32> to vector<2x8x1xf32>
    %65 = vector.broadcast %64 : vector<2x8x1xf32> to vector<2x8x8xf32>
    %66 = arith.divf %62, %65 : vector<2x8x8xf32>
    %67 = arith.truncf %66 : vector<2x8x8xf32> to vector<2x8x8xbf16>
    "tpu.trace_start"() <{level = 10 : i32, message = "bnm,bmd->bnd"}> : () -> ()
    %cst_25 = arith.constant dense<0.000000e+00> : vector<2x8x8xf32>
    %68 = tpu.matmul %67, %56, %cst_25 {dimension_numbers = #tpu.dot_dimension_numbers<[2], [1], [1], [2], [0, 0, 0, 1, 1, 2], [0], [0]>} : vector<2x8x8xbf16>, vector<2x8x8xbf16>, vector<2x8x8xf32> -> vector<2x8x8xf32>
    "tpu.trace_stop"() : () -> ()
    %c0_26 = arith.constant 0 : index
    %c0_27 = arith.constant 0 : index
    %c8 = arith.constant 8 : index
    %69 = vector.load %arg12[%c0_26, %c0_27, %c8] : memref<2x8x32xf32, #tpu.memory_space<vmem>>, vector<2x8x8xf32>
    tpu.vector_store %arg12[%c0_26, %c0_27, %c8], %68 {strides = array<i32>} : memref<2x8x32xf32, #tpu.memory_space<vmem>>, vector<2x8x8xf32>,
    %70 = vector.extract_strided_slice %29 {offsets = [0, 0, 16], sizes = [2, 8, 8], strides = [1, 1, 1]} : vector<2x8x32xf32> to vector<2x8x8xf32>
    %71 = arith.truncf %70 : vector<2x8x8xf32> to vector<2x8x8xbf16>
    %72 = vector.extract_strided_slice %30 {offsets = [0, 0, 16], sizes = [2, 8, 8], strides = [1, 1, 1]} : vector<2x8x32xf32> to vector<2x8x8xf32>
    %73 = arith.truncf %72 : vector<2x8x8xf32> to vector<2x8x8xbf16>
    %74 = vector.extract_strided_slice %31 {offsets = [0, 0, 16], sizes = [2, 8, 8], strides = [1, 1, 1]} : vector<2x8x32xf32> to vector<2x8x8xf32>
    %75 = arith.truncf %74 : vector<2x8x8xf32> to vector<2x8x8xbf16>
    "tpu.trace_start"() <{level = 10 : i32, message = "bnd,bmd->bnm"}> : () -> ()
    %cst_28 = arith.constant dense<0.000000e+00> : vector<2x8x8xf32>
    %76 = tpu.matmul %71, %73, %cst_28 {dimension_numbers = #tpu.dot_dimension_numbers<[2], [2], [1], [1], [0, 0, 0, 1, 1, 1], [0], [0]>} : vector<2x8x8xbf16>, vector<2x8x8xbf16>, vector<2x8x8xf32> -> vector<2x8x8xf32>
    "tpu.trace_stop"() : () -> ()
    %cst_29 = arith.constant dense<0xFF800000> : vector<2x8xf32>
    %77 = vector.multi_reduction <maximumf>, %76, %cst_29 [2] : vector<2x8x8xf32> to vector<2x8xf32>
    %78 = vector.shape_cast %77 : vector<2x8xf32> to vector<2x8x1xf32>
    %79 = vector.broadcast %78 : vector<2x8x1xf32> to vector<2x8x8xf32>
    %80 = arith.subf %76, %79 : vector<2x8x8xf32>
    %81 = math.exp %80 : vector<2x8x8xf32>
    %cst_30 = arith.constant dense<0.000000e+00> : vector<2x8xf32>
    %82 = vector.multi_reduction <add>, %81, %cst_30 [2] : vector<2x8x8xf32> to vector<2x8xf32>
    %83 = vector.shape_cast %82 : vector<2x8xf32> to vector<2x8x1xf32>
    %84 = vector.broadcast %83 : vector<2x8x1xf32> to vector<2x8x8xf32>
    %85 = arith.divf %81, %84 : vector<2x8x8xf32>
    %86 = arith.truncf %85 : vector<2x8x8xf32> to vector<2x8x8xbf16>
    "tpu.trace_start"() <{level = 10 : i32, message = "bnm,bmd->bnd"}> : () -> ()
    %cst_31 = arith.constant dense<0.000000e+00> : vector<2x8x8xf32>
    %87 = tpu.matmul %86, %75, %cst_31 {dimension_numbers = #tpu.dot_dimension_numbers<[2], [1], [1], [2], [0, 0, 0, 1, 1, 2], [0], [0]>} : vector<2x8x8xbf16>, vector<2x8x8xbf16>, vector<2x8x8xf32> -> vector<2x8x8xf32>
    "tpu.trace_stop"() : () -> ()
    %c0_32 = arith.constant 0 : index
    %c0_33 = arith.constant 0 : index
    %c16 = arith.constant 16 : index
    %88 = vector.load %arg12[%c0_32, %c0_33, %c16] : memref<2x8x32xf32, #tpu.memory_space<vmem>>, vector<2x8x8xf32>
    tpu.vector_store %arg12[%c0_32, %c0_33, %c16], %87 {strides = array<i32>} : memref<2x8x32xf32, #tpu.memory_space<vmem>>, vector<2x8x8xf32>,
    %89 = vector.extract_strided_slice %29 {offsets = [0, 0, 24], sizes = [2, 8, 8], strides = [1, 1, 1]} : vector<2x8x32xf32> to vector<2x8x8xf32>
    %90 = arith.truncf %89 : vector<2x8x8xf32> to vector<2x8x8xbf16>
    %91 = vector.extract_strided_slice %30 {offsets = [0, 0, 24], sizes = [2, 8, 8], strides = [1, 1, 1]} : vector<2x8x32xf32> to vector<2x8x8xf32>
    %92 = arith.truncf %91 : vector<2x8x8xf32> to vector<2x8x8xbf16>
    %93 = vector.extract_strided_slice %31 {offsets = [0, 0, 24], sizes = [2, 8, 8], strides = [1, 1, 1]} : vector<2x8x32xf32> to vector<2x8x8xf32>
    %94 = arith.truncf %93 : vector<2x8x8xf32> to vector<2x8x8xbf16>
    "tpu.trace_start"() <{level = 10 : i32, message = "bnd,bmd->bnm"}> : () -> ()
    %cst_34 = arith.constant dense<0.000000e+00> : vector<2x8x8xf32>
    %95 = tpu.matmul %90, %92, %cst_34 {dimension_numbers = #tpu.dot_dimension_numbers<[2], [2], [1], [1], [0, 0, 0, 1, 1, 1], [0], [0]>} : vector<2x8x8xbf16>, vector<2x8x8xbf16>, vector<2x8x8xf32> -> vector<2x8x8xf32>
    "tpu.trace_stop"() : () -> ()
    %cst_35 = arith.constant dense<0xFF800000> : vector<2x8xf32>
    %96 = vector.multi_reduction <maximumf>, %95, %cst_35 [2] : vector<2x8x8xf32> to vector<2x8xf32>
    %97 = vector.shape_cast %96 : vector<2x8xf32> to vector<2x8x1xf32>
    %98 = vector.broadcast %97 : vector<2x8x1xf32> to vector<2x8x8xf32>
    %99 = arith.subf %95, %98 : vector<2x8x8xf32>
    %100 = math.exp %99 : vector<2x8x8xf32>
    %cst_36 = arith.constant dense<0.000000e+00> : vector<2x8xf32>
    %101 = vector.multi_reduction <add>, %100, %cst_36 [2] : vector<2x8x8xf32> to vector<2x8xf32>
    %102 = vector.shape_cast %101 : vector<2x8xf32> to vector<2x8x1xf32>
    %103 = vector.broadcast %102 : vector<2x8x1xf32> to vector<2x8x8xf32>
    %104 = arith.divf %100, %103 : vector<2x8x8xf32>
    %105 = arith.truncf %104 : vector<2x8x8xf32> to vector<2x8x8xbf16>
    "tpu.trace_start"() <{level = 10 : i32, message = "bnm,bmd->bnd"}> : () -> ()
    %cst_37 = arith.constant dense<0.000000e+00> : vector<2x8x8xf32>
    %106 = tpu.matmul %105, %94, %cst_37 {dimension_numbers = #tpu.dot_dimension_numbers<[2], [1], [1], [2], [0, 0, 0, 1, 1, 2], [0], [0]>} : vector<2x8x8xbf16>, vector<2x8x8xbf16>, vector<2x8x8xf32> -> vector<2x8x8xf32>
    "tpu.trace_stop"() : () -> ()
    %c0_38 = arith.constant 0 : index
    %c0_39 = arith.constant 0 : index
    %c24 = arith.constant 24 : index
    %107 = vector.load %arg12[%c0_38, %c0_39, %c24] : memref<2x8x32xf32, #tpu.memory_space<vmem>>, vector<2x8x8xf32>
    tpu.vector_store %arg12[%c0_38, %c0_39, %c24], %106 {strides = array<i32>} : memref<2x8x32xf32, #tpu.memory_space<vmem>>, vector<2x8x8xf32>,
    %c0_40 = arith.constant 0 : index
    %c0_41 = arith.constant 0 : index
    %c0_42 = arith.constant 0 : index
    %108 = vector.load %arg12[%c0_40, %c0_41, %c0_42] : memref<2x8x32xf32, #tpu.memory_space<vmem>>, vector<2x8x32xf32>
    %109 = vector.shape_cast %108 : vector<2x8x32xf32> to vector<16x32xf32>
    %110 = arith.truncf %109 : vector<16x32xf32> to vector<16x32xbf16>
    %c0_43 = arith.constant 0 : index
    %c0_44 = arith.constant 0 : index
    %111 = vector.load %arg5[%c0_43, %c0_44] : memref<32x32xbf16, #tpu.memory_space<vmem>>, vector<32x32xbf16>
    %cst_45 = arith.constant dense<0.000000e+00> : vector<16x32xf32>
    %112 = tpu.matmul %110, %111, %cst_45 {dimension_numbers = #tpu.dot_dimension_numbers<[1], [0], [0], [1], [0, 0, 1, 1], [], []>} : vector<16x32xbf16>, vector<32x32xbf16>, vector<16x32xf32> -> vector<16x32xf32>
    %c0_46 = arith.constant 0 : index
    %c0_47 = arith.constant 0 : index
    %113 = vector.load %arg6[%c0_46, %c0_47] : memref<1x32xf32, #tpu.memory_space<vmem>>, vector<1x32xf32>
    %114 = vector.broadcast %113 : vector<1x32xf32> to vector<16x32xf32>
    %115 = arith.addf %112, %114 : vector<16x32xf32>
    %116 = arith.addf %0, %115 : vector<16x32xf32>
    %cst_48 = arith.constant dense<0.000000e+00> : vector<16xf32>
    %117 = vector.multi_reduction <add>, %116, %cst_48 [1] : vector<16x32xf32> to vector<16xf32>
    %118 = vector.shape_cast %117 : vector<16xf32> to vector<16x1xf32>
    %cst_49 = arith.constant 3.200000e+01 : f32
    %119 = vector.broadcast %cst_49 : f32 to vector<16x1xf32>
    %120 = arith.divf %118, %119 : vector<16x1xf32>
    %121 = vector.broadcast %120 : vector<16x1xf32> to vector<16x32xf32>
    %122 = arith.subf %116, %121 : vector<16x32xf32>
    %123 = arith.mulf %122, %122 : vector<16x32xf32>
    %cst_50 = arith.constant dense<0.000000e+00> : vector<16xf32>
    %124 = vector.multi_reduction <add>, %123, %cst_50 [1] : vector<16x32xf32> to vector<16xf32>
    %125 = vector.shape_cast %124 : vector<16xf32> to vector<16x1xf32>
    %cst_51 = arith.constant 3.200000e+01 : f32
    %126 = vector.broadcast %cst_51 : f32 to vector<16x1xf32>
    %127 = arith.divf %125, %126 : vector<16x1xf32>
    %cst_52 = arith.constant 9.99999974E-6 : f32
    %128 = vector.broadcast %cst_52 : f32 to vector<16x1xf32>
    %129 = arith.addf %127, %128 : vector<16x1xf32>
    %130 = math.rsqrt %129 : vector<16x1xf32>
    %131 = vector.broadcast %130 : vector<16x1xf32> to vector<16x32xf32>
    %132 = arith.mulf %122, %131 : vector<16x32xf32>
    %133 = arith.truncf %132 : vector<16x32xf32> to vector<16x32xbf16>
    %c0_53 = arith.constant 0 : index
    %c0_54 = arith.constant 0 : index
    %134 = vector.load %arg7[%c0_53, %c0_54] : memref<32x128xbf16, #tpu.memory_space<vmem>>, vector<32x128xbf16>
    %cst_55 = arith.constant dense<0.000000e+00> : vector<16x128xf32>
    %135 = tpu.matmul %133, %134, %cst_55 {dimension_numbers = #tpu.dot_dimension_numbers<[1], [0], [0], [1], [0, 0, 1, 1], [], []>} : vector<16x32xbf16>, vector<32x128xbf16>, vector<16x128xf32> -> vector<16x128xf32>
    %c0_56 = arith.constant 0 : index
    %c0_57 = arith.constant 0 : index
    %136 = vector.load %arg8[%c0_56, %c0_57] : memref<1x128xf32, #tpu.memory_space<vmem>>, vector<1x128xf32>
    %137 = vector.broadcast %136 : vector<1x128xf32> to vector<16x128xf32>
    %138 = arith.addf %135, %137 : vector<16x128xf32>
    %cst_58 = arith.constant 5.000000e-01 : f32
    %139 = vector.broadcast %cst_58 : f32 to vector<16x128xf32>
    %140 = arith.mulf %139, %138 : vector<16x128xf32>
    %cst_59 = arith.constant 0.707106769 : f32
    %141 = vector.broadcast %cst_59 : f32 to vector<16x128xf32>
    %142 = arith.mulf %138, %141 : vector<16x128xf32>
    %143 = math.absf %142 : vector<16x128xf32>
    %cst_60 = arith.constant 0.327591091 : f32
    %144 = vector.broadcast %cst_60 : f32 to vector<16x128xf32>
    %145 = arith.mulf %144, %143 : vector<16x128xf32>
    %cst_61 = arith.constant 1.000000e+00 : f32
    %146 = vector.broadcast %cst_61 : f32 to vector<16x128xf32>
    %147 = arith.addf %146, %145 : vector<16x128xf32>
    %cst_62 = arith.constant 1.000000e+00 : f32
    %148 = vector.broadcast %cst_62 : f32 to vector<16x128xf32>
    %149 = arith.divf %148, %147 : vector<16x128xf32>
    %150 = arith.mulf %149, %149 : vector<16x128xf32>
    %cst_63 = arith.constant -0.284496725 : f32
    %151 = vector.broadcast %cst_63 : f32 to vector<16x128xf32>
    %152 = arith.mulf %151, %149 : vector<16x128xf32>
    %cst_64 = arith.constant 0.254829586 : f32
    %153 = vector.broadcast %cst_64 : f32 to vector<16x128xf32>
    %154 = arith.addf %153, %152 : vector<16x128xf32>
    %155 = arith.mulf %154, %149 : vector<16x128xf32>
    %cst_65 = arith.constant -1.45315206 : f32
    %156 = vector.broadcast %cst_65 : f32 to vector<16x128xf32>
    %157 = arith.mulf %156, %149 : vector<16x128xf32>
    %cst_66 = arith.constant 1.42141378 : f32
    %158 = vector.broadcast %cst_66 : f32 to vector<16x128xf32>
    %159 = arith.addf %158, %157 : vector<16x128xf32>
    %cst_67 = arith.constant 1.06140542 : f32
    %160 = vector.broadcast %cst_67 : f32 to vector<16x128xf32>
    %161 = arith.mulf %160, %150 : vector<16x128xf32>
    %162 = arith.addf %159, %161 : vector<16x128xf32>
    %163 = arith.mulf %150, %149 : vector<16x128xf32>
    %164 = arith.mulf %162, %163 : vector<16x128xf32>
    %165 = arith.addf %155, %164 : vector<16x128xf32>
    %cst_68 = arith.constant 0.000000e+00 : f32
    %166 = vector.broadcast %cst_68 : f32 to vector<16x128xf32>
    %167 = arith.subf %166, %143 : vector<16x128xf32>
    %168 = arith.mulf %167, %143 : vector<16x128xf32>
    %169 = math.exp %168 : vector<16x128xf32>
    %170 = arith.mulf %165, %169 : vector<16x128xf32>
    %cst_69 = arith.constant 1.000000e+00 : f32
    %171 = vector.broadcast %cst_69 : f32 to vector<16x128xf32>
    %172 = arith.subf %171, %170 : vector<16x128xf32>
    %cst_70 = arith.constant 0.000000e+00 : f32
    %173 = vector.broadcast %cst_70 : f32 to vector<16x128xf32>
    %174 = arith.cmpf olt, %142, %173 : vector<16x128xf32>
    %cst_71 = arith.constant 0.000000e+00 : f32
    %175 = vector.broadcast %cst_71 : f32 to vector<16x128xf32>
    %176 = arith.subf %175, %172 : vector<16x128xf32>
    %177 = arith.select %174, %176, %172 : vector<16x128xi1>, vector<16x128xf32>
    %cst_72 = arith.constant 1.000000e+00 : f32
    %178 = vector.broadcast %cst_72 : f32 to vector<16x128xf32>
    %179 = arith.addf %178, %177 : vector<16x128xf32>
    %180 = arith.mulf %140, %179 : vector<16x128xf32>
    %181 = arith.truncf %180 : vector<16x128xf32> to vector<16x128xbf16>
    %c0_73 = arith.constant 0 : index
    %c0_74 = arith.constant 0 : index
    %182 = vector.load %arg9[%c0_73, %c0_74] : memref<128x32xbf16, #tpu.memory_space<vmem>>, vector<128x32xbf16>
    %cst_75 = arith.constant dense<0.000000e+00> : vector<16x32xf32>
    %183 = tpu.matmul %181, %182, %cst_75 {dimension_numbers = #tpu.dot_dimension_numbers<[1], [0], [0], [1], [0, 0, 1, 1], [], []>} : vector<16x128xbf16>, vector<128x32xbf16>, vector<16x32xf32> -> vector<16x32xf32>
    %184 = arith.addf %116, %183 : vector<16x32xf32>
    %c0_76 = arith.constant 0 : index
    %c0_77 = arith.constant 0 : index
    %185 = vector.load %arg10[%c0_76, %c0_77] : memref<1x32xf32, #tpu.memory_space<vmem>>, vector<1x32xf32>
    %186 = vector.broadcast %185 : vector<1x32xf32> to vector<16x32xf32>
    %187 = arith.addf %184, %186 : vector<16x32xf32>
    %c0_78 = arith.constant 0 : index
    %c0_79 = arith.constant 0 : index
    %188 = vector.load %arg11[%c0_78, %c0_79] : memref<16x32xf32, #tpu.memory_space<vmem>>, vector<16x32xf32>
    tpu.vector_store %arg11[%c0_78, %c0_79], %187 {strides = array<i32>} : memref<16x32xf32, #tpu.memory_space<vmem>>, vector<16x32xf32>,
    return
  }
}

</mosaic_0001>

<llo_original>
// kernel: tpu_custom_call.1
$region0: #{tpu_custom_call.1}
  #allocation0 [shape = 'u32[]', space=smem, size = 0x4, offset = 0x4, fixed_abs, tag = 'smem constant byte address 0x4 - core index']
  #allocation1 [shape = 'u32[72,128]{1,0:T(1,128)}', space=vmem, size = 0x9000, scoped, tag = 'internal scratch']
  #allocation2 [shape = 'f32[2,8,32]{2,1,0:T(8,128)}', space=vmem, size = 0x2000, scoped, tag = 'scratch operand']
  %s0 = inlined_call_operand.vmem [shape: f32[16,32], index: 0, kind: input, shape index: {}]
  %s1 = inlined_call_operand.vmem [shape: f32[16,32], index: 1, kind: input, shape index: {}]
  %s2 = inlined_call_operand.vmem [shape: bf16[32,32], index: 2, kind: input, shape index: {}]
  %s3 = inlined_call_operand.vmem [shape: f32[1,32], index: 3, kind: input, shape index: {}]
  %s4 = inlined_call_operand.vmem [shape: bf16[32,64], index: 4, kind: input, shape index: {}]
  %s5 = inlined_call_operand.vmem [shape: bf16[32,32], index: 5, kind: input, shape index: {}]
  %s6 = inlined_call_operand.vmem [shape: f32[1,32], index: 6, kind: input, shape index: {}]
  %s7 = inlined_call_operand.hbm [shape: bf16[32,128], index: 7, kind: input, shape index: {}]
  %s8 = inlined_call_operand.vmem [shape: f32[1,128], index: 8, kind: input, shape index: {}]
  %s9 = inlined_call_operand.vmem [shape: bf16[128,32], index: 9, kind: input, shape index: {}]
  %s10 = inlined_call_operand.vmem [shape: f32[1,32], index: 10, kind: input, shape index: {}]
  %s11 = inlined_call_operand.hbm [shape: f32[16,32], index: 11, kind: output, shape index: {}]
  %s12 = sld [smem:[#allocation0]]
  $region58: #{tpu_custom_call.1} parent=0
    _
  %s14 = ssub.s32 1, %s12
  %s15 = scalar_select 0, %s14, %s12
  $region1: #{tpu_custom_call.1} parent=0
    #allocation3 [shape = 'u8[8192]{0}', space=vmem, size = 0x2000, scoped, tag = 'input window, operand 7, single buffered']
    #allocation4 [shape = 's32[1]{0}', space=sflag, size = 0x4, scoped, tag = 'scoped memory for tpu_custom_call.1']
    #allocation5 [shape = 's32[1]{0}', space=sflag, size = 0x4, scoped, tag = 'scoped memory for tpu_custom_call.1']
    #allocation6 [shape = 'u8[8192]{0}', space=vmem, size = 0x2000, scoped, tag = 'output window, operand 0, single buffered']
    %16 = vsyncpa [#allocation4], 0
    %17 = vsyncpa [#allocation5], 0
    // Predicated region
    $region2: #{tpu_custom_call.1} parent=1 // pred_check
      _
    $region3: #{tpu_custom_call.1} parent=1 // pred_check_branch
      %19 = sbr.rel (0) target = $region5
    $region4: #{tpu_custom_call.1} parent=1 // pred_region
      _
    $region5: #{tpu_custom_call.1} parent=1 // pred_fallthru
      _
    // Predicated region
    $region6: #{tpu_custom_call.1} parent=1 // pred_check
      _
    $region7: #{tpu_custom_call.1} parent=1 // pred_check_branch
      %21 = sbr.rel (0) target = $region9
    $region8: #{tpu_custom_call.1} parent=1 // pred_region
      _
    $region9: #{tpu_custom_call.1} parent=1 // pred_fallthru
      _
    // Predicated region
    $region10: #{tpu_custom_call.1} parent=1 // pred_check
      _
    $region11: #{tpu_custom_call.1} parent=1 // pred_check_branch
      %23 = sbr.rel (0) target = $region13
    $region12: #{tpu_custom_call.1} parent=1 // pred_region
      _
    $region13: #{tpu_custom_call.1} parent=1 // pred_fallthru
      _
    // Predicated region
    $region14: #{tpu_custom_call.1} parent=1 // pred_check
      _
    $region15: #{tpu_custom_call.1} parent=1 // pred_check_branch
      %25 = sbr.rel (0) target = $region17
    $region16: #{tpu_custom_call.1} parent=1 // pred_region
      _
    $region17: #{tpu_custom_call.1} parent=1 // pred_fallthru
      _
    // Predicated region
    $region18: #{tpu_custom_call.1} parent=1 // pred_check
      _
    $region19: #{tpu_custom_call.1} parent=1 // pred_check_branch
      %27 = sbr.rel (0) target = $region21
    $region20: #{tpu_custom_call.1} parent=1 // pred_region
      _
    $region21: #{tpu_custom_call.1} parent=1 // pred_fallthru
      _
    // Predicated region
    $region22: #{tpu_custom_call.1} parent=1 // pred_check
      _
    $region23: #{tpu_custom_call.1} parent=1 // pred_check_branch
      %29 = sbr.rel (0) target = $region25
    $region24: #{tpu_custom_call.1} parent=1 // pred_region
      _
    $region25: #{tpu_custom_call.1} parent=1 // pred_fallthru
      _
    // Predicated region
    $region26: #{tpu_custom_call.1} parent=1 // pred_check
      _
    $region27: #{tpu_custom_call.1} parent=1 // pred_check_branch
      %31 = sbr.rel (0) target = $region29
    $region28: #{tpu_custom_call.1} parent=1 // pred_region
      _
    $region29: #{tpu_custom_call.1} parent=1 // pred_fallthru
      _
    // Predicated region
    $region30: #{tpu_custom_call.1} parent=1 // pred_check
      _
    $region31: #{tpu_custom_call.1} parent=1 // pred_check_branch
      %33 = sbr.rel (0) target = $region33
    $region32: #{tpu_custom_call.1} parent=1 // pred_region
      %35 = vsyncadd [#allocation4], 0
      %s36 = sshll.u32 %s7, 4
      %s37 = int_to_ptr.hbm [resolvable:$true] %s36
      %s38 = sshll.u32 [#allocation3], 4
      %s39 = int_to_ptr.vmem [resolvable:$true] %s38
      %44 = dma.hbm_to_vmem [thread:$0]  %s37, 256, %s39, [#allocation4], 64, 64, 4
    $region33: #{tpu_custom_call.1} parent=1 // pred_fallthru
      _
    // Predicated region
    $region34: #{tpu_custom_call.1} parent=1 // pred_check
      _
    $region35: #{tpu_custom_call.1} parent=1 // pred_check_branch
      %46 = sbr.rel (0) target = $region37
    $region36: #{tpu_custom_call.1} parent=1 // pred_region
      _
    $region37: #{tpu_custom_call.1} parent=1 // pred_fallthru
      _
    // Predicated region
    $region38: #{tpu_custom_call.1} parent=1 // pred_check
      _
    $region39: #{tpu_custom_call.1} parent=1 // pred_check_branch
      %48 = sbr.rel (0) target = $region41
    $region40: #{tpu_custom_call.1} parent=1 // pred_region
      _
    $region41: #{tpu_custom_call.1} parent=1 // pred_fallthru
      _
    // Predicated region
    $region42: #{tpu_custom_call.1} parent=1 // pred_check
      _
    $region43: #{tpu_custom_call.1} parent=1 // pred_check_branch
      %50 = sbr.rel (0) target = $region45
    $region44: #{tpu_custom_call.1} parent=1 // pred_region
      _
    $region45: #{tpu_custom_call.1} parent=1 // pred_fallthru
      _
    // Predicated region
    $region46: #{tpu_custom_call.1} parent=1 // pred_check
      _
    $region47: #{tpu_custom_call.1} parent=1 // pred_check_branch
      %52 = sbr.rel (0) target = $region49
    $region48: #{tpu_custom_call.1} parent=1 // pred_region
      %54 = dma.done [#allocation4], 256
    $region49: #{tpu_custom_call.1} parent=1 // pred_fallthru
      _
    %v56 = vld [vmem:[%s0] sm:$0xff]
    %v57 = vld [vmem:[%s0 + $0x8] sm:$0xff]
    %v58 = vld [vmem:[%s1] sm:$0xff]
    %v59 = vld [vmem:[%s1 + $0x8] sm:$0xff]
    %vm60 = vcmask 261120
    %v61 = vsel %vm60, %v56, 0.0
    %62 = vadd.xlane.f32.xlu0 %v61
    %v63 = vpop.xlane.xlu0 %62
    %v64 = vsel %vm60, %v57, 0.0
    %65 = vadd.xlane.f32.xlu0 %v64
    %v66 = vpop.xlane.xlu0 %65
    %v67 = vrcp.pop 32.0
    %v68 = vmul.f32 32.0, %v67
    %v69 = vsub.f32 1.0, %v68
    %v70 = vmul.f32 %v67, %v69
    %v71 = vadd.f32 %v67, %v70
    %vm72 = vweird.f32 %v67
    %v73 = vsel %vm72, %v67, %v71
    %v74 = vmul.f32 %v63, %v73
    %v75 = vmul.f32 %v66, %v73
    %v76 = vsub.f32 %v56, %v74
    %v77 = vsub.f32 %v57, %v75
    %v78 = vmul.f32 %v76, %v76
    %v79 = vmul.f32 %v77, %v77
    %v80 = vsel %vm60, %v78, 0.0
    %81 = vadd.xlane.f32.xlu0 %v80
    %v82 = vpop.xlane.xlu0 %81
    %v83 = vsel %vm60, %v79, 0.0
    %84 = vadd.xlane.f32.xlu0 %v83
    %v85 = vpop.xlane.xlu0 %84
    %v86 = vmul.f32 %v82, %v73
    %v87 = vmul.f32 %v85, %v73
    %v88 = vadd.f32 %v86, 1e-05
    %v89 = vadd.f32 %v87, 1e-05
    %v90 = vrsqrt.pop %v88
    %v91 = vmul.f32 %v90, %v88
    %v92 = vmul.f32 %v91, %v90
    %v93 = vmul.f32 0.5, %v92
    %v94 = vsub.f32 1.5, %v93
    %v95 = vmul.f32 %v90, %v94
    %vm96 = vweird.f32 %v88
    %vm97 = vweird.f32 %v90
    %vm98 = vmor %vm96, %vm97
    %v99 = vsel %vm98, %v90, %v95
    %v100 = vrsqrt.pop %v89
    %v101 = vmul.f32 %v100, %v89
    %v102 = vmul.f32 %v101, %v100
    %v103 = vmul.f32 0.5, %v102
    %v104 = vsub.f32 1.5, %v103
    %v105 = vmul.f32 %v100, %v104
    %vm106 = vweird.f32 %v89
    %vm107 = vweird.f32 %v100
    %vm108 = vmor %vm106, %vm107
    %v109 = vsel %vm108, %v100, %v105
    %v110 = vmul.f32 %v76, %v99
    %v111 = vmul.f32 %v77, %v109
    %v112 = vpack.c.bf16 %v111, %v110
    %v113 = vld [vmem:[%s2] sm:$0xf]
    %v114 = vld [vmem:[%s2 + $0x4] sm:$0xf]
    %v115 = vld [vmem:[%s2 + $0x8] sm:$0xf]
    %v116 = vld [vmem:[%s2 + $0xc] sm:$0xf]
    %v117 = vld [vmem:[%s3] sm:$0x1]
    %v119 = vperm.slane %v117, 0
    %v125 = vunpack.c.l.b16 %v113
    %v126 = vunpack.c.l.b16 %v114
    %v127 = vunpack.c.l.b16 %v115
    %v128 = vunpack.c.l.b16 %v116
    %v129 = vpack.c.b16 %v126, %v125
    %v130 = vpack.c.b16 %v128, %v127
    %v134 = vsel %vm60, %v112, 0
    %136 = vmatpush.bf16.msra.mxu0 0
    %137 = vmatpush.bf16.msra.mxu0 0
    %138 = vmatpush.bf16.msra.mxu0 0
    %139 = vmatpush.bf16.msra.mxu0 0
    %140 = vmatpush.bf16.msra.mxu0 0
    %141 = vmatpush.bf16.msra.mxu0 0
    %142 = vmatpush.bf16.msra.mxu0 %v130
    %143 = vmatpush.bf16.msra.mxu0 %v129
    %144 = vmatmul.bf16.gmra.mxu0 %v134
    %v145 = vpop.f32.mrf.mxu0
    %v146 = vadd.f32 %v119, %v145
    %v147 = vpop.f32.mrf.mxu0
    %v148 = vadd.f32 %v119, %v147
    %149 = vdwg.mxu0
    %v150 = vpack.c.bf16 %v59, %v58
    %v151 = vld [vmem:[%s4] sm:$0xf]
    %v152 = vld [vmem:[%s4 + $0x4] sm:$0xf]
    %v153 = vld [vmem:[%s4 + $0x8] sm:$0xf]
    %v154 = vld [vmem:[%s4 + $0xc] sm:$0xf]
    %v159 = vunpack.c.l.b16 %v151
    %v160 = vunpack.c.l.b16 %v152
    %v161 = vunpack.c.l.b16 %v153
    %v162 = vunpack.c.l.b16 %v154
    %v163 = vpack.c.b16 %v160, %v159
    %v164 = vpack.c.b16 %v162, %v161
    %v168 = vsel %vm60, %v150, 0
    %170 = vmatpush.bf16.msra.mxu0 0
    %171 = vmatpush.bf16.msra.mxu0 0
    %172 = vmatpush.bf16.msra.mxu0 0
    %173 = vmatpush.bf16.msra.mxu0 0
    %174 = vmatpush.bf16.msra.mxu0 0
    %175 = vmatpush.bf16.msra.mxu0 0
    %176 = vmatpush.bf16.msra.mxu0 %v164
    %177 = vmatpush.bf16.msra.mxu0 %v163
    %178 = vmatmul.bf16.gmra.mxu0 %v168
    %v179 = vpop.f32.mrf.mxu0
    %v180 = vadd.f32 0.0, %v179
    %v181 = vpop.f32.mrf.mxu0
    %v182 = vadd.f32 0.0, %v181
    %183 = vdwg.mxu0
    %v184 = vpack.c.bf16 %v146, %v146
    %v185 = vpack.c.bf16 %v148, %v148
    %v186 = vpack.c.bf16 %v180, %v180
    %v187 = vpack.c.bf16 %v182, %v182
    %vm188 = vcmask 64512
    %v190 = vsel %vm188, %v184, 0
    %v193 = vsel %vm188, %v186, 0
    %195 = vmatpush.bf16.xpose.msra.mxu0 0
    %196 = vmatpush.bf16.xpose.msra.mxu0 0
    %197 = vmatpush.bf16.xpose.msra.mxu0 0
    %198 = vmatpush.bf16.xpose.msra.mxu0 0
    %199 = vmatpush.bf16.xpose.msra.mxu0 0
    %200 = vmatpush.bf16.xpose.msra.mxu0 0
    %201 = vmatpush.bf16.xpose.msra.mxu0 0
    %202 = vmatpush.bf16.xpose.msra.mxu0 %v193
    %203 = vmatmul.bf16.gmra.mxu0 %v190
    %v204 = vpop.f32.mrf.mxu0
    %v205 = vadd.f32 0.0, %v204
    %v206 = vpop.f32.mrf.mxu0
    %207 = vdwg.mxu0
    %v209 = vsel %vm188, %v185, 0
    %v212 = vsel %vm188, %v187, 0
    %214 = vmatpush.bf16.xpose.msra.mxu0 0
    %215 = vmatpush.bf16.xpose.msra.mxu0 0
    %216 = vmatpush.bf16.xpose.msra.mxu0 0
    %217 = vmatpush.bf16.xpose.msra.mxu0 0
    %218 = vmatpush.bf16.xpose.msra.mxu0 0
    %219 = vmatpush.bf16.xpose.msra.mxu0 0
    %220 = vmatpush.bf16.xpose.msra.mxu0 0
    %221 = vmatpush.bf16.xpose.msra.mxu0 %v212
    %222 = vmatmul.bf16.gmra.mxu0 %v209
    %v223 = vpop.f32.mrf.mxu0
    %v224 = vadd.f32 0.0, %v223
    %v225 = vpop.f32.mrf.mxu0
    %226 = vdwg.mxu0
    %v227 = vsel %vm188, %v205, -inf
    %228 = vmax.xlane.f32.xlu0 %v227
    %v229 = vpop.xlane.xlu0 %228
    %v230 = vsel %vm188, %v224, -inf
    %231 = vmax.xlane.f32.xlu0 %v230
    %v232 = vpop.xlane.xlu0 %231
    %v233 = vsub.f32 %v205, %v229
    %v234 = vsub.f32 %v224, %v232
    %v235 = vmul.f32 %v233, 1.442695
    %v236 = vpow.pop %v235
    %v237 = vmul.f32 %v234, 1.442695
    %v238 = vpow.pop %v237
    %v239 = vsel %vm188, %v236, 0.0
    %240 = vadd.xlane.f32.xlu0 %v239
    %v241 = vpop.xlane.xlu0 %240
    %v242 = vsel %vm188, %v238, 0.0
    %243 = vadd.xlane.f32.xlu0 %v242
    %v244 = vpop.xlane.xlu0 %243
    %v245 = vrcp.pop %v241
    %v246 = vmul.f32 %v241, %v245
    %v247 = vsub.f32 1.0, %v246
    %v248 = vmul.f32 %v245, %v247
    %v249 = vadd.f32 %v245, %v248
    %vm250 = vweird.f32 %v241
    %vm251 = vweird.f32 %v245
    %vm252 = vmor %vm250, %vm251
    %v253 = vsel %vm252, %v245, %v249
    %v254 = vand.u32 2147483647, %v241
    %vm255 = vcmp.eq.f32.partialorder %v254, 8.507059e+37
    %v256 = vand.u32 %v241, 2147483648
    %v257 = vor.u32 1.1754944e-38, %v256
    %v258 = vsel %vm255, %v257, %v253
    %v259 = vmul.f32 %v236, %v258
    %v260 = vrcp.pop %v244
    %v261 = vmul.f32 %v244, %v260
    %v262 = vsub.f32 1.0, %v261
    %v263 = vmul.f32 %v260, %v262
    %v264 = vadd.f32 %v260, %v263
    %vm265 = vweird.f32 %v244
    %vm266 = vweird.f32 %v260
    %vm267 = vmor %vm265, %vm266
    %v268 = vsel %vm267, %v260, %v264
    %v269 = vand.u32 2147483647, %v244
    %vm270 = vcmp.eq.f32.partialorder %v269, 8.507059e+37
    %v271 = vand.u32 %v244, 2147483648
    %v272 = vor.u32 1.1754944e-38, %v271
    %v273 = vsel %vm270, %v272, %v268
    %v274 = vmul.f32 %v238, %v273
    %v275 = vpack.c.bf16 %v259, %v259
    %v276 = vpack.c.bf16 %v274, %v274
    %v278 = vunpack.c.l.b16 %v186
    %v279 = vpack.c.b16 %v278, %v278
    %280 = vrot.lane.b32.xlu0 %v279, 96
    %v281 = vpop.permute.xlu0 %280
    %v283 = vsel %vm188, %v275, 0
    %vm285 = vcmask 1043456
    %v287 = vsel %vm285, %v281, 0
    %289 = vmatpush.bf16.msra.mxu0 0
    %290 = vmatpush.bf16.msra.mxu0 0
    %291 = vmatpush.bf16.msra.mxu0 0
    %292 = vmatpush.bf16.msra.mxu0 0
    %293 = vmatpush.bf16.msra.mxu0 0
    %294 = vmatpush.bf16.msra.mxu0 0
    %295 = vmatpush.bf16.msra.mxu0 0
    %296 = vmatpush.bf16.msra.mxu0 %v287
    %297 = vmatmul.bf16.gmra.mxu0 %v283
    %v298 = vpop.f32.mrf.mxu0
    %v299 = vadd.f32 0.0, %v298
    %v300 = vpop.f32.mrf.mxu0
    %301 = vdwg.mxu0
    %v303 = vunpack.c.l.b16 %v187
    %v304 = vpack.c.b16 %v303, %v303
    %305 = vrot.lane.b32.xlu0 %v304, 96
    %v306 = vpop.permute.xlu0 %305
    %v308 = vsel %vm188, %v276, 0
    %v311 = vsel %vm285, %v306, 0
    %313 = vmatpush.bf16.msra.mxu0 0
    %314 = vmatpush.bf16.msra.mxu0 0
    %315 = vmatpush.bf16.msra.mxu0 0
    %316 = vmatpush.bf16.msra.mxu0 0
    %317 = vmatpush.bf16.msra.mxu0 0
    %318 = vmatpush.bf16.msra.mxu0 0
    %319 = vmatpush.bf16.msra.mxu0 0
    %320 = vmatpush.bf16.msra.mxu0 %v311
    %321 = vmatmul.bf16.gmra.mxu0 %v308
    %v322 = vpop.f32.mrf.mxu0
    %v323 = vadd.f32 0.0, %v322
    %v324 = vpop.f32.mrf.mxu0
    %325 = vdwg.mxu0
    %326 = vst.msk [vmem:[#allocation2] sm:$0xff] %vm188, %v299
    %327 = vst.msk [vmem:[#allocation2 + $0x8] sm:$0xff] %vm188, %v323
    %v329 = vunpack.c.l.b16 %v184
    %v330 = vpack.c.b16 %v329, %v329
    %331 = vrot.lane.b32.xlu0 %v330, 120
    %v332 = vpop.permute.xlu0 %331
    %333 = vrot.lane.b32.xlu0 %v279, 120
    %v334 = vpop.permute.xlu0 %333
    %v336 = vsel %vm188, %v332, 0
    %v339 = vsel %vm188, %v334, 0
    %341 = vmatpush.bf16.xpose.msra.mxu0 0
    %342 = vmatpush.bf16.xpose.msra.mxu0 0
    %343 = vmatpush.bf16.xpose.msra.mxu0 0
    %344 = vmatpush.bf16.xpose.msra.mxu0 0
    %345 = vmatpush.bf16.xpose.msra.mxu0 0
    %346 = vmatpush.bf16.xpose.msra.mxu0 0
    %347 = vmatpush.bf16.xpose.msra.mxu0 0
    %348 = vmatpush.bf16.xpose.msra.mxu0 %v339
    %349 = vmatmul.bf16.gmra.mxu0 %v336
    %v350 = vpop.f32.mrf.mxu0
    %v351 = vadd.f32 0.0, %v350
    %v352 = vpop.f32.mrf.mxu0
    %353 = vdwg.mxu0
    %v355 = vunpack.c.l.b16 %v185
    %v356 = vpack.c.b16 %v355, %v355
    %357 = vrot.lane.b32.xlu0 %v356, 120
    %v358 = vpop.permute.xlu0 %357
    %359 = vrot.lane.b32.xlu0 %v304, 120
    %v360 = vpop.permute.xlu0 %359
    %v362 = vsel %vm188, %v358, 0
    %v365 = vsel %vm188, %v360, 0
    %367 = vmatpush.bf16.xpose.msra.mxu0 0
    %368 = vmatpush.bf16.xpose.msra.mxu0 0
    %369 = vmatpush.bf16.xpose.msra.mxu0 0
    %370 = vmatpush.bf16.xpose.msra.mxu0 0
    %371 = vmatpush.bf16.xpose.msra.mxu0 0
    %372 = vmatpush.bf16.xpose.msra.mxu0 0
    %373 = vmatpush.bf16.xpose.msra.mxu0 0
    %374 = vmatpush.bf16.xpose.msra.mxu0 %v365
    %375 = vmatmul.bf16.gmra.mxu0 %v362
    %v376 = vpop.f32.mrf.mxu0
    %v377 = vadd.f32 0.0, %v376
    %v378 = vpop.f32.mrf.mxu0
    %379 = vdwg.mxu0
    %v380 = vsel %vm188, %v351, -inf
    %381 = vmax.xlane.f32.xlu0 %v380
    %v382 = vpop.xlane.xlu0 %381
    %v383 = vsel %vm188, %v377, -inf
    %384 = vmax.xlane.f32.xlu0 %v383
    %v385 = vpop.xlane.xlu0 %384
    %v386 = vsub.f32 %v351, %v382
    %v387 = vsub.f32 %v377, %v385
    %v388 = vmul.f32 %v386, 1.442695
    %v389 = vpow.pop %v388
    %v390 = vmul.f32 %v387, 1.442695
    %v391 = vpow.pop %v390
    %v392 = vsel %vm188, %v389, 0.0
    %393 = vadd.xlane.f32.xlu0 %v392
    %v394 = vpop.xlane.xlu0 %393
    %v395 = vsel %vm188, %v391, 0.0
    %396 = vadd.xlane.f32.xlu0 %v395
    %v397 = vpop.xlane.xlu0 %396
    %v398 = vrcp.pop %v394
    %v399 = vmul.f32 %v394, %v398
    %v400 = vsub.f32 1.0, %v399
    %v401 = vmul.f32 %v398, %v400
    %v402 = vadd.f32 %v398, %v401
    %vm403 = vweird.f32 %v394
    %vm404 = vweird.f32 %v398
    %vm405 = vmor %vm403, %vm404
    %v406 = vsel %vm405, %v398, %v402
    %v407 = vand.u32 2147483647, %v394
    %vm408 = vcmp.eq.f32.partialorder %v407, 8.507059e+37
    %v409 = vand.u32 %v394, 2147483648
    %v410 = vor.u32 1.1754944e-38, %v409
    %v411 = vsel %vm408, %v410, %v406
    %v412 = vmul.f32 %v389, %v411
    %v413 = vrcp.pop %v397
    %v414 = vmul.f32 %v397, %v413
    %v415 = vsub.f32 1.0, %v414
    %v416 = vmul.f32 %v413, %v415
    %v417 = vadd.f32 %v413, %v416
    %vm418 = vweird.f32 %v397
    %vm419 = vweird.f32 %v413
    %vm420 = vmor %vm418, %vm419
    %v421 = vsel %vm420, %v413, %v417
    %v422 = vand.u32 2147483647, %v397
    %vm423 = vcmp.eq.f32.partialorder %v422, 8.507059e+37
    %v424 = vand.u32 %v397, 2147483648
    %v425 = vor.u32 1.1754944e-38, %v424
    %v426 = vsel %vm423, %v425, %v421
    %v427 = vmul.f32 %v391, %v426
    %v428 = vpack.c.bf16 %v412, %v412
    %v429 = vpack.c.bf16 %v427, %v427
    %430 = vrot.lane.b32.xlu0 %v279, 88
    %v431 = vpop.permute.xlu0 %430
    %v433 = vsel %vm188, %v428, 0
    %v436 = vsel %vm285, %v431, 0
    %438 = vmatpush.bf16.msra.mxu0 0
    %439 = vmatpush.bf16.msra.mxu0 0
    %440 = vmatpush.bf16.msra.mxu0 0
    %441 = vmatpush.bf16.msra.mxu0 0
    %442 = vmatpush.bf16.msra.mxu0 0
    %443 = vmatpush.bf16.msra.mxu0 0
    %444 = vmatpush.bf16.msra.mxu0 0
    %445 = vmatpush.bf16.msra.mxu0 %v436
    %446 = vmatmul.bf16.gmra.mxu0 %v433
    %v447 = vpop.f32.mrf.mxu0
    %v448 = vadd.f32 0.0, %v447
    %v449 = vpop.f32.mrf.mxu0
    %450 = vdwg.mxu0
    %451 = vrot.lane.b32.xlu0 %v304, 88
    %v452 = vpop.permute.xlu0 %451
    %v454 = vsel %vm188, %v429, 0
    %v457 = vsel %vm285, %v452, 0
    %459 = vmatpush.bf16.msra.mxu0 0
    %460 = vmatpush.bf16.msra.mxu0 0
    %461 = vmatpush.bf16.msra.mxu0 0
    %462 = vmatpush.bf16.msra.mxu0 0
    %463 = vmatpush.bf16.msra.mxu0 0
    %464 = vmatpush.bf16.msra.mxu0 0
    %465 = vmatpush.bf16.msra.mxu0 0
    %466 = vmatpush.bf16.msra.mxu0 %v457
    %467 = vmatmul.bf16.gmra.mxu0 %v454
    %v468 = vpop.f32.mrf.mxu0
    %v469 = vadd.f32 0.0, %v468
    %v470 = vpop.f32.mrf.mxu0
    %471 = vdwg.mxu0
    %474 = vrot.lane.b32.xlu0 %v448, 8
    %v475 = vpop.permute.xlu0 %474
    %476 = vrot.lane.b32.xlu0 %v469, 8
    %v477 = vpop.permute.xlu0 %476
    %vm480 = vcmask 130112
    %481 = vst.msk [vmem:[#allocation2] sm:$0xff] %vm480, %v475
    %482 = vst.msk [vmem:[#allocation2 + $0x8] sm:$0xff] %vm480, %v477
    %483 = vrot.lane.b32.xlu0 %v330, 112
    %v484 = vpop.permute.xlu0 %483
    %485 = vrot.lane.b32.xlu0 %v279, 112
    %v486 = vpop.permute.xlu0 %485
    %v488 = vsel %vm188, %v484, 0
    %v491 = vsel %vm188, %v486, 0
    %493 = vmatpush.bf16.xpose.msra.mxu0 0
    %494 = vmatpush.bf16.xpose.msra.mxu0 0
    %495 = vmatpush.bf16.xpose.msra.mxu0 0
    %496 = vmatpush.bf16.xpose.msra.mxu0 0
    %497 = vmatpush.bf16.xpose.msra.mxu0 0
    %498 = vmatpush.bf16.xpose.msra.mxu0 0
    %499 = vmatpush.bf16.xpose.msra.mxu0 0
    %500 = vmatpush.bf16.xpose.msra.mxu0 %v491
    %501 = vmatmul.bf16.gmra.mxu0 %v488
    %v502 = vpop.f32.mrf.mxu0
    %v503 = vadd.f32 0.0, %v502
    %v504 = vpop.f32.mrf.mxu0
    %505 = vdwg.mxu0
    %506 = vrot.lane.b32.xlu0 %v356, 112
    %v507 = vpop.permute.xlu0 %506
    %508 = vrot.lane.b32.xlu0 %v304, 112
    %v509 = vpop.permute.xlu0 %508
    %v511 = vsel %vm188, %v507, 0
    %v514 = vsel %vm188, %v509, 0
    %516 = vmatpush.bf16.xpose.msra.mxu0 0
    %517 = vmatpush.bf16.xpose.msra.mxu0 0
    %518 = vmatpush.bf16.xpose.msra.mxu0 0
    %519 = vmatpush.bf16.xpose.msra.mxu0 0
    %520 = vmatpush.bf16.xpose.msra.mxu0 0
    %521 = vmatpush.bf16.xpose.msra.mxu0 0
    %522 = vmatpush.bf16.xpose.msra.mxu0 0
    %523 = vmatpush.bf16.xpose.msra.mxu0 %v514
    %524 = vmatmul.bf16.gmra.mxu0 %v511
    %v525 = vpop.f32.mrf.mxu0
    %v526 = vadd.f32 0.0, %v525
    %v527 = vpop.f32.mrf.mxu0
    %528 = vdwg.mxu0
    %v529 = vsel %vm188, %v503, -inf
    %530 = vmax.xlane.f32.xlu0 %v529
    %v531 = vpop.xlane.xlu0 %530
    %v532 = vsel %vm188, %v526, -inf
    %533 = vmax.xlane.f32.xlu0 %v532
    %v534 = vpop.xlane.xlu0 %533
    %v535 = vsub.f32 %v503, %v531
    %v536 = vsub.f32 %v526, %v534
    %v537 = vmul.f32 %v535, 1.442695
    %v538 = vpow.pop %v537
    %v539 = vmul.f32 %v536, 1.442695
    %v540 = vpow.pop %v539
    %v541 = vsel %vm188, %v538, 0.0
    %542 = vadd.xlane.f32.xlu0 %v541
    %v543 = vpop.xlane.xlu0 %542
    %v544 = vsel %vm188, %v540, 0.0
    %545 = vadd.xlane.f32.xlu0 %v544
    %v546 = vpop.xlane.xlu0 %545
    %v547 = vrcp.pop %v543
    %v548 = vmul.f32 %v543, %v547
    %v549 = vsub.f32 1.0, %v548
    %v550 = vmul.f32 %v547, %v549
    %v551 = vadd.f32 %v547, %v550
    %vm552 = vweird.f32 %v543
    %vm553 = vweird.f32 %v547
    %vm554 = vmor %vm552, %vm553
    %v555 = vsel %vm554, %v547, %v551
    %v556 = vand.u32 2147483647, %v543
    %vm557 = vcmp.eq.f32.partialorder %v556, 8.507059e+37
    %v558 = vand.u32 %v543, 2147483648
    %v559 = vor.u32 1.1754944e-38, %v558
    %v560 = vsel %vm557, %v559, %v555
    %v561 = vmul.f32 %v538, %v560
    %v562 = vrcp.pop %v546
    %v563 = vmul.f32 %v546, %v562
    %v564 = vsub.f32 1.0, %v563
    %v565 = vmul.f32 %v562, %v564
    %v566 = vadd.f32 %v562, %v565
    %vm567 = vweird.f32 %v546
    %vm568 = vweird.f32 %v562
    %vm569 = vmor %vm567, %vm568
    %v570 = vsel %vm569, %v562, %v566
    %v571 = vand.u32 2147483647, %v546
    %vm572 = vcmp.eq.f32.partialorder %v571, 8.507059e+37
    %v573 = vand.u32 %v546, 2147483648
    %v574 = vor.u32 1.1754944e-38, %v573
    %v575 = vsel %vm572, %v574, %v570
    %v576 = vmul.f32 %v540, %v575
    %v577 = vpack.c.bf16 %v561, %v561
    %v578 = vpack.c.bf16 %v576, %v576
    %579 = vrot.lane.b32.xlu0 %v279, 80
    %v580 = vpop.permute.xlu0 %579
    %v582 = vsel %vm188, %v577, 0
    %v585 = vsel %vm285, %v580, 0
    %587 = vmatpush.bf16.msra.mxu0 0
    %588 = vmatpush.bf16.msra.mxu0 0
    %589 = vmatpush.bf16.msra.mxu0 0
    %590 = vmatpush.bf16.msra.mxu0 0
    %591 = vmatpush.bf16.msra.mxu0 0
    %592 = vmatpush.bf16.msra.mxu0 0
    %593 = vmatpush.bf16.msra.mxu0 0
    %594 = vmatpush.bf16.msra.mxu0 %v585
    %595 = vmatmul.bf16.gmra.mxu0 %v582
    %v596 = vpop.f32.mrf.mxu0
    %v597 = vadd.f32 0.0, %v596
    %v598 = vpop.f32.mrf.mxu0
    %599 = vdwg.mxu0
    %600 = vrot.lane.b32.xlu0 %v304, 80
    %v601 = vpop.permute.xlu0 %600
    %v603 = vsel %vm188, %v578, 0
    %v606 = vsel %vm285, %v601, 0
    %608 = vmatpush.bf16.msra.mxu0 0
    %609 = vmatpush.bf16.msra.mxu0 0
    %610 = vmatpush.bf16.msra.mxu0 0
    %611 = vmatpush.bf16.msra.mxu0 0
    %612 = vmatpush.bf16.msra.mxu0 0
    %613 = vmatpush.bf16.msra.mxu0 0
    %614 = vmatpush.bf16.msra.mxu0 0
    %615 = vmatpush.bf16.msra.mxu0 %v606
    %616 = vmatmul.bf16.gmra.mxu0 %v603
    %v617 = vpop.f32.mrf.mxu0
    %v618 = vadd.f32 0.0, %v617
    %v619 = vpop.f32.mrf.mxu0
    %620 = vdwg.mxu0
    %623 = vrot.lane.b32.xlu0 %v597, 16
    %v624 = vpop.permute.xlu0 %623
    %625 = vrot.lane.b32.xlu0 %v618, 16
    %v626 = vpop.permute.xlu0 %625
    %vm629 = vcmask 195712
    %630 = vst.msk [vmem:[#allocation2] sm:$0xff] %vm629, %v624
    %631 = vst.msk [vmem:[#allocation2 + $0x8] sm:$0xff] %vm629, %v626
    %632 = vrot.lane.b32.xlu0 %v330, 104
    %v633 = vpop.permute.xlu0 %632
    %634 = vrot.lane.b32.xlu0 %v279, 104
    %v635 = vpop.permute.xlu0 %634
    %v637 = vsel %vm188, %v633, 0
    %v640 = vsel %vm188, %v635, 0
    %642 = vmatpush.bf16.xpose.msra.mxu0 0
    %643 = vmatpush.bf16.xpose.msra.mxu0 0
    %644 = vmatpush.bf16.xpose.msra.mxu0 0
    %645 = vmatpush.bf16.xpose.msra.mxu0 0
    %646 = vmatpush.bf16.xpose.msra.mxu0 0
    %647 = vmatpush.bf16.xpose.msra.mxu0 0
    %648 = vmatpush.bf16.xpose.msra.mxu0 0
    %649 = vmatpush.bf16.xpose.msra.mxu0 %v640
    %650 = vmatmul.bf16.gmra.mxu0 %v637
    %v651 = vpop.f32.mrf.mxu0
    %v652 = vadd.f32 0.0, %v651
    %v653 = vpop.f32.mrf.mxu0
    %654 = vdwg.mxu0
    %655 = vrot.lane.b32.xlu0 %v356, 104
    %v656 = vpop.permute.xlu0 %655
    %657 = vrot.lane.b32.xlu0 %v304, 104
    %v658 = vpop.permute.xlu0 %657
    %v660 = vsel %vm188, %v656, 0
    %v663 = vsel %vm188, %v658, 0
    %665 = vmatpush.bf16.xpose.msra.mxu0 0
    %666 = vmatpush.bf16.xpose.msra.mxu0 0
    %667 = vmatpush.bf16.xpose.msra.mxu0 0
    %668 = vmatpush.bf16.xpose.msra.mxu0 0
    %669 = vmatpush.bf16.xpose.msra.mxu0 0
    %670 = vmatpush.bf16.xpose.msra.mxu0 0
    %671 = vmatpush.bf16.xpose.msra.mxu0 0
    %672 = vmatpush.bf16.xpose.msra.mxu0 %v663
    %673 = vmatmul.bf16.gmra.mxu0 %v660
    %v674 = vpop.f32.mrf.mxu0
    %v675 = vadd.f32 0.0, %v674
    %v676 = vpop.f32.mrf.mxu0
    %677 = vdwg.mxu0
    %v678 = vsel %vm188, %v652, -inf
    %679 = vmax.xlane.f32.xlu0 %v678
    %v680 = vpop.xlane.xlu0 %679
    %v681 = vsel %vm188, %v675, -inf
    %682 = vmax.xlane.f32.xlu0 %v681
    %v683 = vpop.xlane.xlu0 %682
    %v684 = vsub.f32 %v652, %v680
    %v685 = vsub.f32 %v675, %v683
    %v686 = vmul.f32 %v684, 1.442695
    %v687 = vpow.pop %v686
    %v688 = vmul.f32 %v685, 1.442695
    %v689 = vpow.pop %v688
    %v690 = vsel %vm188, %v687, 0.0
    %691 = vadd.xlane.f32.xlu0 %v690
    %v692 = vpop.xlane.xlu0 %691
    %v693 = vsel %vm188, %v689, 0.0
    %694 = vadd.xlane.f32.xlu0 %v693
    %v695 = vpop.xlane.xlu0 %694
    %v696 = vrcp.pop %v692
    %v697 = vmul.f32 %v692, %v696
    %v698 = vsub.f32 1.0, %v697
    %v699 = vmul.f32 %v696, %v698
    %v700 = vadd.f32 %v696, %v699
    %vm701 = vweird.f32 %v692
    %vm702 = vweird.f32 %v696
    %vm703 = vmor %vm701, %vm702
    %v704 = vsel %vm703, %v696, %v700
    %v705 = vand.u32 2147483647, %v692
    %vm706 = vcmp.eq.f32.partialorder %v705, 8.507059e+37
    %v707 = vand.u32 %v692, 2147483648
    %v708 = vor.u32 1.1754944e-38, %v707
    %v709 = vsel %vm706, %v708, %v704
    %v710 = vmul.f32 %v687, %v709
    %v711 = vrcp.pop %v695
    %v712 = vmul.f32 %v695, %v711
    %v713 = vsub.f32 1.0, %v712
    %v714 = vmul.f32 %v711, %v713
    %v715 = vadd.f32 %v711, %v714
    %vm716 = vweird.f32 %v695
    %vm717 = vweird.f32 %v711
    %vm718 = vmor %vm716, %vm717
    %v719 = vsel %vm718, %v711, %v715
    %v720 = vand.u32 2147483647, %v695
    %vm721 = vcmp.eq.f32.partialorder %v720, 8.507059e+37
    %v722 = vand.u32 %v695, 2147483648
    %v723 = vor.u32 1.1754944e-38, %v722
    %v724 = vsel %vm721, %v723, %v719
    %v725 = vmul.f32 %v689, %v724
    %v726 = vpack.c.bf16 %v710, %v710
    %v727 = vpack.c.bf16 %v725, %v725
    %728 = vrot.lane.b32.xlu0 %v279, 72
    %v729 = vpop.permute.xlu0 %728
    %v731 = vsel %vm188, %v726, 0
    %v734 = vsel %vm285, %v729, 0
    %736 = vmatpush.bf16.msra.mxu0 0
    %737 = vmatpush.bf16.msra.mxu0 0
    %738 = vmatpush.bf16.msra.mxu0 0
    %739 = vmatpush.bf16.msra.mxu0 0
    %740 = vmatpush.bf16.msra.mxu0 0
    %741 = vmatpush.bf16.msra.mxu0 0
    %742 = vmatpush.bf16.msra.mxu0 0
    %743 = vmatpush.bf16.msra.mxu0 %v734
    %744 = vmatmul.bf16.gmra.mxu0 %v731
    %v745 = vpop.f32.mrf.mxu0
    %v746 = vadd.f32 0.0, %v745
    %v747 = vpop.f32.mrf.mxu0
    %748 = vdwg.mxu0
    %749 = vrot.lane.b32.xlu0 %v304, 72
    %v750 = vpop.permute.xlu0 %749
    %v752 = vsel %vm188, %v727, 0
    %v755 = vsel %vm285, %v750, 0
    %757 = vmatpush.bf16.msra.mxu0 0
    %758 = vmatpush.bf16.msra.mxu0 0
    %759 = vmatpush.bf16.msra.mxu0 0
    %760 = vmatpush.bf16.msra.mxu0 0
    %761 = vmatpush.bf16.msra.mxu0 0
    %762 = vmatpush.bf16.msra.mxu0 0
    %763 = vmatpush.bf16.msra.mxu0 0
    %764 = vmatpush.bf16.msra.mxu0 %v755
    %765 = vmatmul.bf16.gmra.mxu0 %v752
    %v766 = vpop.f32.mrf.mxu0
    %v767 = vadd.f32 0.0, %v766
    %v768 = vpop.f32.mrf.mxu0
    %769 = vdwg.mxu0
    %772 = vrot.lane.b32.xlu0 %v746, 24
    %v773 = vpop.permute.xlu0 %772
    %774 = vrot.lane.b32.xlu0 %v767, 24
    %v775 = vpop.permute.xlu0 %774
    %vm778 = vcmask 261312
    %779 = vst.msk [vmem:[#allocation2] sm:$0xff] %vm778, %v773
    %780 = vst.msk [vmem:[#allocation2 + $0x8] sm:$0xff] %vm778, %v775
    %v781 = vld [vmem:[#allocation2] sm:$0xff]
    %v782 = vld [vmem:[#allocation2 + $0x8] sm:$0xff]
    %v783 = vpack.c.bf16 %v782, %v781
    %v784 = vld [vmem:[%s5] sm:$0xf]
    %v785 = vld [vmem:[%s5 + $0x4] sm:$0xf]
    %v786 = vld [vmem:[%s5 + $0x8] sm:$0xf]
    %v787 = vld [vmem:[%s5 + $0xc] sm:$0xf]
    %v788 = vld [vmem:[%s6] sm:$0x1]
    %v790 = vperm.slane %v788, 0
    %v796 = vunpack.c.l.b16 %v784
    %v797 = vunpack.c.l.b16 %v785
    %v798 = vunpack.c.l.b16 %v786
    %v799 = vunpack.c.l.b16 %v787
    %v800 = vpack.c.b16 %v797, %v796
    %v801 = vpack.c.b16 %v799, %v798
    %v805 = vsel %vm60, %v783, 0
    %807 = vmatpush.bf16.msra.mxu0 0
    %808 = vmatpush.bf16.msra.mxu0 0
    %809 = vmatpush.bf16.msra.mxu0 0
    %810 = vmatpush.bf16.msra.mxu0 0
    %811 = vmatpush.bf16.msra.mxu0 0
    %812 = vmatpush.bf16.msra.mxu0 0
    %813 = vmatpush.bf16.msra.mxu0 %v801
    %814 = vmatpush.bf16.msra.mxu0 %v800
    %815 = vmatmul.bf16.gmra.mxu0 %v805
    %v816 = vpop.f32.mrf.mxu0
    %v817 = vadd.f32 %v790, %v816
    %v818 = vpop.f32.mrf.mxu0
    %v819 = vadd.f32 %v790, %v818
    %820 = vdwg.mxu0
    %v821 = vadd.f32 %v56, %v817
    %v822 = vadd.f32 %v57, %v819
    %v823 = vsel %vm60, %v821, 0.0
    %824 = vadd.xlane.f32.xlu0 %v823
    %v825 = vpop.xlane.xlu0 %824
    %v826 = vsel %vm60, %v822, 0.0
    %827 = vadd.xlane.f32.xlu0 %v826
    %v828 = vpop.xlane.xlu0 %827
    %v829 = vmul.f32 %v825, %v73
    %v830 = vmul.f32 %v828, %v73
    %v831 = vsub.f32 %v821, %v829
    %v832 = vsub.f32 %v822, %v830
    %v833 = vmul.f32 %v831, %v831
    %v834 = vmul.f32 %v832, %v832
    %v835 = vsel %vm60, %v833, 0.0
    %836 = vadd.xlane.f32.xlu0 %v835
    %v837 = vpop.xlane.xlu0 %836
    %v838 = vsel %vm60, %v834, 0.0
    %839 = vadd.xlane.f32.xlu0 %v838
    %v840 = vpop.xlane.xlu0 %839
    %v841 = vmul.f32 %v837, %v73
    %v842 = vmul.f32 %v840, %v73
    %v843 = vadd.f32 %v841, 1e-05
    %v844 = vadd.f32 %v842, 1e-05
    %v845 = vrsqrt.pop %v843
    %v846 = vmul.f32 %v845, %v843
    %v847 = vmul.f32 %v846, %v845
    %v848 = vmul.f32 0.5, %v847
    %v849 = vsub.f32 1.5, %v848
    %v850 = vmul.f32 %v845, %v849
    %vm851 = vweird.f32 %v843
    %vm852 = vweird.f32 %v845
    %vm853 = vmor %vm851, %vm852
    %v854 = vsel %vm853, %v845, %v850
    %v855 = vrsqrt.pop %v844
    %v856 = vmul.f32 %v855, %v844
    %v857 = vmul.f32 %v856, %v855
    %v858 = vmul.f32 0.5, %v857
    %v859 = vsub.f32 1.5, %v858
    %v860 = vmul.f32 %v855, %v859
    %vm861 = vweird.f32 %v844
    %vm862 = vweird.f32 %v855
    %vm863 = vmor %vm861, %vm862
    %v864 = vsel %vm863, %v855, %v860
    %v865 = vmul.f32 %v831, %v854
    %v866 = vmul.f32 %v832, %v864
    %v867 = vpack.c.bf16 %v866, %v865
    %v868 = vld [vmem:[#allocation3] sm:$0xf]
    %v869 = vld [vmem:[#allocation3 + $0x4] sm:$0xf]
    %v870 = vld [vmem:[#allocation3 + $0x8] sm:$0xf]
    %v871 = vld [vmem:[#allocation3 + $0xc] sm:$0xf]
    %v872 = vld [vmem:[%s8] sm:$0x1]
    %v874 = vperm.slane %v872, 0
    %v880 = vunpack.c.l.b16 %v868
    %v881 = vunpack.c.l.b16 %v869
    %v882 = vunpack.c.l.b16 %v870
    %v883 = vunpack.c.l.b16 %v871
    %v884 = vpack.c.b16 %v881, %v880
    %v885 = vpack.c.b16 %v883, %v882
    %v889 = vsel %vm60, %v867, 0
    %891 = vmatpush.bf16.msra.mxu0 0
    %892 = vmatpush.bf16.msra.mxu0 0
    %893 = vmatpush.bf16.msra.mxu0 0
    %894 = vmatpush.bf16.msra.mxu0 0
    %895 = vmatpush.bf16.msra.mxu0 0
    %896 = vmatpush.bf16.msra.mxu0 0
    %897 = vmatpush.bf16.msra.mxu0 %v885
    %898 = vmatpush.bf16.msra.mxu0 %v884
    %899 = vmatmul.bf16.gmra.mxu0 %v889
    %v900 = vpop.f32.mrf.mxu0
    %v901 = vadd.f32 %v874, %v900
    %v902 = vpop.f32.mrf.mxu0
    %v903 = vadd.f32 %v874, %v902
    %904 = vdwg.mxu0
    %v905 = vmul.f32 %v901, 0.5
    %v906 = vmul.f32 %v903, 0.5
    %v907 = vmul.f32 %v901, 0.70710677
    %v908 = vmul.f32 %v903, 0.70710677
    %v909 = vand.u32 2147483647, %v907
    %v910 = vand.u32 2147483647, %v908
    %v911 = vmul.f32 %v909, 0.3275911
    %v912 = vmul.f32 %v910, 0.3275911
    %v913 = vadd.f32 %v911, 1.0
    %v914 = vadd.f32 %v912, 1.0
    %v915 = vrcp.pop %v913
    %v916 = vmul.f32 %v913, %v915
    %v917 = vsub.f32 1.0, %v916
    %v918 = vmul.f32 %v915, %v917
    %v919 = vadd.f32 %v915, %v918
    %vm920 = vweird.f32 %v913
    %vm921 = vweird.f32 %v915
    %vm922 = vmor %vm920, %vm921
    %v923 = vsel %vm922, %v915, %v919
    %v924 = vand.u32 2147483647, %v913
    %vm925 = vcmp.eq.f32.partialorder %v924, 8.507059e+37
    %v926 = vand.u32 %v913, 2147483648
    %v927 = vor.u32 1.1754944e-38, %v926
    %v928 = vsel %vm925, %v927, %v923
    %v929 = vmul.f32 1.0, %v928
    %v930 = vrcp.pop %v914
    %v931 = vmul.f32 %v914, %v930
    %v932 = vsub.f32 1.0, %v931
    %v933 = vmul.f32 %v930, %v932
    %v934 = vadd.f32 %v930, %v933
    %vm935 = vweird.f32 %v914
    %vm936 = vweird.f32 %v930
    %vm937 = vmor %vm935, %vm936
    %v938 = vsel %vm937, %v930, %v934
    %v939 = vand.u32 2147483647, %v914
    %vm940 = vcmp.eq.f32.partialorder %v939, 8.507059e+37
    %v941 = vand.u32 %v914, 2147483648
    %v942 = vor.u32 1.1754944e-38, %v941
    %v943 = vsel %vm940, %v942, %v938
    %v944 = vmul.f32 1.0, %v943
    %v945 = vmul.f32 %v929, %v929
    %v946 = vmul.f32 %v944, %v944
    %v947 = vmul.f32 %v929, -0.28449672
    %v948 = vmul.f32 %v944, -0.28449672
    %v949 = vadd.f32 %v947, 0.2548296
    %v950 = vadd.f32 %v948, 0.2548296
    %v951 = vmul.f32 %v949, %v929
    %v952 = vmul.f32 %v950, %v944
    %v953 = vmul.f32 %v929, -1.4531521
    %v954 = vmul.f32 %v944, -1.4531521
    %v955 = vadd.f32 %v953, 1.4214138
    %v956 = vadd.f32 %v954, 1.4214138
    %v957 = vmul.f32 %v945, 1.0614054
    %v958 = vmul.f32 %v946, 1.0614054
    %v959 = vadd.f32 %v955, %v957
    %v960 = vadd.f32 %v956, %v958
    %v961 = vmul.f32 %v945, %v929
    %v962 = vmul.f32 %v946, %v944
    %v963 = vmul.f32 %v959, %v961
    %v964 = vmul.f32 %v960, %v962
    %v965 = vadd.f32 %v951, %v963
    %v966 = vadd.f32 %v952, %v964
    %v967 = vsub.f32 0.0, %v909
    %v968 = vsub.f32 0.0, %v910
    %v969 = vmul.f32 %v967, %v909
    %v970 = vmul.f32 %v968, %v910
    %v971 = vmul.f32 %v969, 1.442695
    %v972 = vpow.pop %v971
    %v973 = vmul.f32 %v970, 1.442695
    %v974 = vpow.pop %v973
    %v975 = vmul.f32 %v965, %v972
    %v976 = vmul.f32 %v966, %v974
    %v977 = vsub.f32 1.0, %v975
    %v978 = vsub.f32 1.0, %v976
    %vm979 = vcmp.lt.f32.partialorder %v907, 0.0
    %vm980 = vcmp.lt.f32.partialorder %v908, 0.0
    %v981 = vsub.f32 0.0, %v977
    %v982 = vsub.f32 0.0, %v978
    %v983 = vsel %vm979, %v981, %v977
    %v984 = vsel %vm980, %v982, %v978
    %v985 = vadd.f32 %v983, 1.0
    %v986 = vadd.f32 %v984, 1.0
    %v987 = vmul.f32 %v905, %v985
    %v988 = vmul.f32 %v906, %v986
    %v989 = vpack.c.bf16 %v988, %v987
    %v990 = vld [vmem:[%s9] sm:$0xf]
    %v991 = vld [vmem:[%s9 + $0x4] sm:$0xf]
    %v992 = vld [vmem:[%s9 + $0x8] sm:$0xf]
    %v993 = vld [vmem:[%s9 + $0xc] sm:$0xf]
    %v994 = vld [vmem:[%s9 + $0x10] sm:$0xf]
    %v995 = vld [vmem:[%s9 + $0x14] sm:$0xf]
    %v996 = vld [vmem:[%s9 + $0x18] sm:$0xf]
    %v997 = vld [vmem:[%s9 + $0x1c] sm:$0xf]
    %v998 = vld [vmem:[%s9 + $0x20] sm:$0xf]
    %v999 = vld [vmem:[%s9 + $0x24] sm:$0xf]
    %v1000 = vld [vmem:[%s9 + $0x28] sm:$0xf]
    %v1001 = vld [vmem:[%s9 + $0x2c] sm:$0xf]
    %v1002 = vld [vmem:[%s9 + $0x30] sm:$0xf]
    %v1003 = vld [vmem:[%s9 + $0x34] sm:$0xf]
    %v1004 = vld [vmem:[%s9 + $0x38] sm:$0xf]
    %v1005 = vld [vmem:[%s9 + $0x3c] sm:$0xf]
    %v1022 = vunpack.c.l.b16 %v990
    %v1023 = vunpack.c.l.b16 %v991
    %v1024 = vunpack.c.l.b16 %v992
    %v1025 = vunpack.c.l.b16 %v993
    %v1026 = vunpack.c.l.b16 %v994
    %v1027 = vunpack.c.l.b16 %v995
    %v1028 = vunpack.c.l.b16 %v996
    %v1029 = vunpack.c.l.b16 %v997
    %v1030 = vunpack.c.l.b16 %v998
    %v1031 = vunpack.c.l.b16 %v999
    %v1032 = vunpack.c.l.b16 %v1000
    %v1033 = vunpack.c.l.b16 %v1001
    %v1034 = vunpack.c.l.b16 %v1002
    %v1035 = vunpack.c.l.b16 %v1003
    %v1036 = vunpack.c.l.b16 %v1004
    %v1037 = vunpack.c.l.b16 %v1005
    %v1038 = vpack.c.b16 %v1023, %v1022
    %v1039 = vpack.c.b16 %v1025, %v1024
    %v1040 = vpack.c.b16 %v1027, %v1026
    %v1041 = vpack.c.b16 %v1029, %v1028
    %v1042 = vpack.c.b16 %v1031, %v1030
    %v1043 = vpack.c.b16 %v1033, %v1032
    %v1044 = vpack.c.b16 %v1035, %v1034
    %v1045 = vpack.c.b16 %v1037, %v1036
    %1054 = vmatpush.bf16.msra.mxu0 %v1045
    %1055 = vmatpush.bf16.msra.mxu0 %v1044
    %1056 = vmatpush.bf16.msra.mxu0 %v1043
    %1057 = vmatpush.bf16.msra.mxu0 %v1042
    %1058 = vmatpush.bf16.msra.mxu0 %v1041
    %1059 = vmatpush.bf16.msra.mxu0 %v1040
    %1060 = vmatpush.bf16.msra.mxu0 %v1039
    %1061 = vmatpush.bf16.msra.mxu0 %v1038
    %1062 = vmatmul.bf16.gmra.mxu0 %v989
    %v1063 = vpop.f32.mrf.mxu0
    %v1064 = vadd.f32 0.0, %v1063
    %v1065 = vpop.f32.mrf.mxu0
    %v1066 = vadd.f32 0.0, %v1065
    %1067 = vdwg.mxu0
    %v1068 = vadd.f32 %v821, %v1064
    %v1069 = vadd.f32 %v822, %v1066
    %v1070 = vld [vmem:[%s10] sm:$0x1]
    %v1072 = vperm.slane %v1070, 0
    %v1074 = vadd.f32 %v1068, %v1072
    %v1075 = vadd.f32 %v1069, %v1072
    %1076 = vst.msk [vmem:[#allocation6] sm:$0xff] %vm60, %v1074
    %1077 = vst.msk [vmem:[#allocation6 + $0x8] sm:$0xff] %vm60, %v1075
    // Predicated region
    $region50: #{tpu_custom_call.1} parent=1 // pred_check
      _
    $region51: #{tpu_custom_call.1} parent=1 // pred_check_branch
      %1079 = sbr.rel (0) target = $region53
    $region52: #{tpu_custom_call.1} parent=1 // pred_region
      %1081 = vsyncadd [#allocation5], 0
      %s1082 = sshll.u32 [#allocation6], 4
      %s1083 = int_to_ptr.vmem [resolvable:$true] %s1082
      %s1084 = sshll.u32 %s11, 4
      %s1085 = int_to_ptr.hbm [resolvable:$true] %s1084
      %1090 = dma.vmem_to_hbm [thread:$0]  %s1083, 256, %s1085, [#allocation5], 128, 128, 8
    $region53: #{tpu_custom_call.1} parent=1 // pred_fallthru
      _
    // Predicated region
    $region54: #{tpu_custom_call.1} parent=1 // pred_check
      _
    $region55: #{tpu_custom_call.1} parent=1 // pred_check_branch
      %1092 = sbr.rel (0) target = $region57
    $region56: #{tpu_custom_call.1} parent=1 // pred_region
      %1094 = dma.done [#allocation5], 256
    $region57: #{tpu_custom_call.1} parent=1 // pred_fallthru
      _
    %1095 = vsyncpa [#allocation4], 1
    %1096 = vsyncpa [#allocation5], 1

</llo_original>
